<compile_context>
chip_gen: v7x
topology: tpu7x:2x2x1
jax: 0.10.0
libtpu: 0.0.40
codegen_flags: <defaults>
</compile_context>

<pallas_src>
import functools

import jax
import jax.numpy as jnp
from jax.experimental import pallas as pl
from jax.experimental.pallas import tpu as pltpu


# ----------------------------------------------------------------------------- kernels


def _crms_kernel(x_ref, scale_ref, o_ref, *, recip_dp1, eps):
    # All arithmetic stays in f32 (v5e VPU/EUP have no bf16 math); sub-32-bit dtypes
    # only appear at the DMA boundary and in the `.type_as(x)` round-trip.
    x = x_ref[...].astype(jnp.float32)                     # x.float()
    row_sum = jnp.sum(x, axis=-1, keepdims=True)           # discarded element
    sq_sum = jnp.sum(x * x, axis=-1, keepdims=True)        # x.square().sum(-1)
    inv = jax.lax.rsqrt((sq_sum + row_sum * row_sum) * recip_dp1 + eps)
    y = (x * inv).astype(x_ref.dtype)                      # .type_as(x)
    o_ref[...] = (scale_ref[...] * y.astype(jnp.float32)).astype(o_ref.dtype)


def _crms_kernel_packed(x_ref, scale_ref, red_ref, exp_ref, o_ref, *, recip_dp1, eps):
    # k logical rows of width d are packed along the 128-wide lane axis (L = k*d = 128).
    #   red (L, L): red[j, s] = 1 if j // d == s   -> column s holds segment-s sums
    #   exp (L, L): exp[s, j] = 1 if j // d == s   -> broadcast per-segment value back
    # Both matmuls are (T,128)@(128,128) f32 on the otherwise-idle MXU, keeping every
    # load/store lane-dense (no masked vst.msk on the output path).
    x = x_ref[...].astype(jnp.float32)                     # (T, 128)
    red = red_ref[...]
    row_sum = jnp.dot(x, red, preferred_element_type=jnp.float32,
                      precision=jax.lax.Precision.HIGHEST)
    sq_sum = jnp.dot(x * x, red, preferred_element_type=jnp.float32,
                     precision=jax.lax.Precision.HIGHEST)
    inv_seg = jax.lax.rsqrt((sq_sum + row_sum * row_sum) * recip_dp1 + eps)
    inv = jnp.dot(inv_seg, exp_ref[...], preferred_element_type=jnp.float32,
                  precision=jax.lax.Precision.HIGHEST)
    y = (x * inv).astype(x_ref.dtype)                      # .type_as(x)
    o_ref[...] = (scale_ref[...] * y.astype(jnp.float32)).astype(o_ref.dtype)


# ----------------------------------------------------------------------------- tiling


def _tpu_vmem_capacity_bytes():
    try:
        return int(pltpu.get_tpu_info().vmem_capacity_bytes)
    except Exception:
        return 64 << 20  # conservative fallback: assume v7x-sized (64 MiB) VMEM


def _choose_tiling(rows, width, in_bytes, out_bytes):
    """Pick (tile_rows, per_row_bytes, vmem_limit_cap) for a [rows, width] slab."""
    vmem_cap = _tpu_vmem_capacity_bytes()
    big_vmem = vmem_cap >= (100 << 20)   # v5e / v6e: 128 MiB VMEM, single TensorCore
    two_tc = not big_vmem                # v7x: 64 MiB per TC, 2 TensorCores per chip
    budget = (56 << 20) if big_vmem else (28 << 20)
    limit_cap = (96 << 20) if big_vmem else (48 << 20)

    # Working set ~= 2 double-buffered input blocks + 2 double-buffered output blocks
    # + f32 temporaries.  For f32 inputs the input block already is the f32 working
    # copy (only ~4 B/elem of temps); sub-f32 inputs also need the upcast (~8 B/elem).
    extra = 4 if in_bytes >= 4 else 8
    per_row = width * (2 * in_bytes + 2 * out_bytes + extra)
    cap = budget // max(per_row, 1)
    cap = max(16, min(cap, 4096))
    cap -= cap % 16                      # sublane granule (bf16 packs 16 rows / vreg)

    if rows <= cap:
        if two_tc and rows >= 256:
            # Split into 2 grid steps so both v7x TensorCores get work through the
            # "parallel" row axis.  Skipped on 1-TC parts (v5e/v6e): one big block.
            half = (rows + 1) // 2
            tile = ((half + 15) // 16) * 16
        else:
            tile = rows                  # one full-array block is always legal
    else:
        steps = pl.cdiv(rows, cap)
        if two_tc and steps < 16 and steps % 2 == 1:
            steps += 1                   # even step count: balanced across the 2 TCs
        tile = ((pl.cdiv(rows, steps) + 15) // 16) * 16
    return tile, per_row, limit_cap


# ----------------------------------------------------------------------------- wrapper


def crms_norm_pallas(x, scale, eps=1e-8, *, preserve_input_dtype=True,
                     tile_rows=None, pack_small_d=True):
    """CRMSNorm forward.  x: (..., d), scale: (d,).

    preserve_input_dtype=True (default) writes the output in x.dtype, halving writeback
    traffic for bf16/fp16 inputs.  Set it to False to reproduce PyTorch's promotion
    exactly (f32 scale * x-typed value -> f32 output).  In-kernel math is f32 either way.
    """
    orig_shape = x.shape
    d = orig_shape[-1]
    xf = x.reshape(-1, d)                # reshape glue only
    rows = xf.shape[0]

    out_dtype = x.dtype if preserve_input_dtype else jnp.promote_types(jnp.float32, x.dtype)
    if rows == 0:
        return jnp.zeros(orig_shape, out_dtype)

    # Lane-dense packing for small d: fold k = 128//d logical rows into the lane axis.
    k = 1
    if pack_small_d and d < 128 and 128 % d == 0 and rows % (128 // d) == 0:
        k = 128 // d
    width = k * d
    prows = rows // k
    x2 = xf if k == 1 else xf.reshape(prows, width)

    scale_f32 = scale.astype(jnp.float32).reshape(-1)
    scale2d = (scale_f32 if k == 1 else jnp.tile(scale_f32, (k,))).reshape(1, width)

    in_bytes = jnp.dtype(x.dtype).itemsize
    out_bytes = jnp.dtype(out_dtype).itemsize
    auto_tile, per_row, limit_cap = _choose_tiling(prows, width, in_bytes, out_bytes)
    if tile_rows is None:
        tile_rows = auto_tile
    else:
        tile_rows = int(min(tile_rows, prows))
        if tile_rows < prows:
            tile_rows = max(16, tile_rows - tile_rows % 16)
    tile_rows = max(1, min(tile_rows, prows))   # clamp==prows -> full-array block, legal

    grid = (pl.cdiv(prows, tile_rows),)

    resident_bytes = 4 * width + (8 * width * width if k > 1 else 0)
    block_bytes = tile_rows * per_row + resident_bytes
    vmem_limit = int(min(max(block_bytes + (8 << 20), 32 << 20), limit_cap))

    kern = functools.partial(_crms_kernel_packed if k > 1 else _crms_kernel,
                             recip_dp1=1.0 / (d + 1), eps=float(eps))

    in_specs = [
        pl.BlockSpec((tile_rows, width), lambda i: (i, 0)),
        # Constant index_map -> the tiny (1, width) f32 scale tile stays VMEM-resident
        # across the whole grid (not re-DMA'd per step).
        pl.BlockSpec((1, width), lambda i: (0, 0)),
    ]
    operands = [x2, scale2d]
    if k > 1:
        idx = jnp.arange(width, dtype=jnp.int32)
        red = (idx[:, None] // d == idx[None, :]).astype(jnp.float32)  # (L, L) 0/1
        operands += [red, red.T]
        in_specs += [pl.BlockSpec((width, width), lambda i: (0, 0)),
                     pl.BlockSpec((width, width), lambda i: (0, 0))]

    out = pl.pallas_call(
        kern,
        out_shape=jax.ShapeDtypeStruct((prows, width), out_dtype),
        grid_spec=pltpu.PrefetchScalarGridSpec(
            num_scalar_prefetch=0,
            grid=grid,
            in_specs=in_specs,
            out_specs=pl.BlockSpec((tile_rows, width), lambda i: (i, 0)),
        ),
        compiler_params=pltpu.CompilerParams(
            dimension_semantics=("parallel",),
            vmem_limit_bytes=vmem_limit,
        ),
    )(*operands)

    return out.reshape(orig_shape)


# --------------------------------------------------------------------------- reference


def crms_norm_reference(x, scale, eps=1e-8):
    """Pure-JAX reference matching the PyTorch module (f32 output)."""
    xf = x.astype(jnp.float32)
    d = xf.shape[-1]
    discarded = jnp.sum(xf, axis=-1, keepdims=True)
    denom = (jnp.sum(xf * xf, axis=-1, keepdims=True) + discarded * discarded) / (d + 1) + eps
    y = (xf * jax.lax.rsqrt(denom)).astype(x.dtype)        # .type_as(x)
    return scale.astype(jnp.float32) * y.astype(jnp.float32)


if __name__ == "__main__":
    key = jax.random.PRNGKey(0)
    k1, k2, k2s, k3 = jax.random.split(key, 4)

    # 1) Module-shaped case: batch=2, seq=8, dim=32, f32, scale=ones (module init).
    #    d=32 < 128 -> exercises the lane-dense packed path (k=4 rows per 128 lanes).
    x1 = jax.random.normal(k1, (2, 8, 32), dtype=jnp.float32)
    s1 = jnp.ones((32,), dtype=jnp.float32)
    r1 = crms_norm_reference(x1, s1, eps=1e-8)
    o1 = jax.block_until_ready(crms_norm_pallas(x1, s1, eps=1e-8))
    assert o1.shape == x1.shape and o1.dtype == jnp.float32, (o1.shape, o1.dtype)
    assert jnp.allclose(o1, r1, atol=1e-4, rtol=1e-4), float(jnp.max(jnp.abs(o1 - r1)))
    # Same case through the plain (unpacked) path.
    o1b = jax.block_until_ready(crms_norm_pallas(x1, s1, eps=1e-8, pack_small_d=False))
    assert jnp.allclose(o1b, r1, atol=1e-5, rtol=1e-5), float(jnp.max(jnp.abs(o1b - r1)))

    # 2) Multi-step grid with a ragged last row-block (280 rows, tile 128, no host pad).
    x2 = jax.random.normal(k2, (4, 70, 256), dtype=jnp.float32)
    s2 = jax.random.normal(k2s, (256,), dtype=jnp.float32)
    o2 = jax.block_until_ready(crms_norm_pallas(x2, s2, eps=1e-8, tile_rows=128))
    r2 = crms_norm_reference(x2, s2, eps=1e-8)
    assert jnp.allclose(o2, r2, atol=1e-5, rtol=1e-5), float(jnp.max(jnp.abs(o2 - r2)))

    # 3) bf16 input.  Default keeps bf16 writeback (half the store traffic);
    #    preserve_input_dtype=False reproduces PyTorch's f32 promotion.
    x3 = jax.random.normal(k3, (2, 8, 256), dtype=jnp.float32).astype(jnp.bfloat16)
    s3 = jnp.ones((256,), dtype=jnp.float32)
    r3 = crms_norm_reference(x3, s3, eps=1e-8)
    o3 = jax.block_until_ready(crms_norm_pallas(x3, s3, eps=1e-8))
    assert o3.dtype == jnp.bfloat16, o3.dtype
    assert jnp.allclose(o3.astype(jnp.float32), r3, atol=2e-2, rtol=2e-2)
    o3f = jax.block_until_ready(crms_norm_pallas(x3, s3, eps=1e-8, preserve_input_dtype=False))
    assert o3f.dtype == jnp.float32, o3f.dtype
    assert jnp.allclose(o3f, r3, atol=1e-4, rtol=1e-4)

    print("KERNEL_OK")
</pallas_src>

<mosaic_0001>
module attributes {stable_mosaic.version = 11 : i64} {
  func.func @_crms_kernel_packed(%arg0: i32, %arg1: memref<4x128xf32, #tpu.memory_space<vmem>>, %arg2: memref<1x128xf32, #tpu.memory_space<vmem>>, %arg3: memref<128x128xf32, #tpu.memory_space<vmem>>, %arg4: memref<128x128xf32, #tpu.memory_space<vmem>>, %arg5: memref<4x128xf32, #tpu.memory_space<vmem>>) attributes {dimension_semantics = [#tpu.dimension_semantics<parallel>], iteration_bounds = array<i64: 1>, scalar_prefetch = 0 : i64, scratch_operands = 0 : i64, tpu.core_type = #tpu.core_type<tc>, window_params = [{transform_indices = @transform_0, window_bounds = array<i64: 4, 128>}, {pipeline_mode = #tpu.pipeline_mode<synchronous>, transform_indices = @transform_1, window_bounds = array<i64: 1, 128>}, {pipeline_mode = #tpu.pipeline_mode<synchronous>, transform_indices = @transform_2, window_bounds = array<i64: 128, 128>}, {pipeline_mode = #tpu.pipeline_mode<synchronous>, transform_indices = @transform_3, window_bounds = array<i64: 128, 128>}, {transform_indices = @transform_4, window_bounds = array<i64: 4, 128>}]} {
    %c0 = arith.constant 0 : index
    %c0_0 = arith.constant 0 : index
    %0 = vector.load %arg1[%c0, %c0_0] : memref<4x128xf32, #tpu.memory_space<vmem>>, vector<4x128xf32>
    %c0_1 = arith.constant 0 : index
    %c0_2 = arith.constant 0 : index
    %1 = vector.load %arg3[%c0_1, %c0_2] : memref<128x128xf32, #tpu.memory_space<vmem>>, vector<128x128xf32>
    %cst = arith.constant dense<0.000000e+00> : vector<4x128xf32>
    %2 = tpu.matmul %0, %1, %cst {dimension_numbers = #tpu.dot_dimension_numbers<[1], [0], [0], [1], [0, 0, 1, 1], [], []>, precision = #tpu.contract_precision<fp32>} : vector<4x128xf32>, vector<128x128xf32>, vector<4x128xf32> -> vector<4x128xf32>
    %3 = arith.mulf %0, %0 : vector<4x128xf32>
    %cst_3 = arith.constant dense<0.000000e+00> : vector<4x128xf32>
    %4 = tpu.matmul %3, %1, %cst_3 {dimension_numbers = #tpu.dot_dimension_numbers<[1], [0], [0], [1], [0, 0, 1, 1], [], []>, precision = #tpu.contract_precision<fp32>} : vector<4x128xf32>, vector<128x128xf32>, vector<4x128xf32> -> vector<4x128xf32>
    %5 = arith.mulf %2, %2 : vector<4x128xf32>
    %6 = arith.addf %4, %5 : vector<4x128xf32>
    %cst_4 = arith.constant 0.0303030312 : f32
    %7 = vector.broadcast %cst_4 : f32 to vector<4x128xf32>
    %8 = arith.mulf %6, %7 : vector<4x128xf32>
    %cst_5 = arith.constant 9.99999993E-9 : f32
    %9 = vector.broadcast %cst_5 : f32 to vector<4x128xf32>
    %10 = arith.addf %8, %9 : vector<4x128xf32>
    %11 = math.rsqrt %10 : vector<4x128xf32>
    %c0_6 = arith.constant 0 : index
    %c0_7 = arith.constant 0 : index
    %12 = vector.load %arg4[%c0_6, %c0_7] : memref<128x128xf32, #tpu.memory_space<vmem>>, vector<128x128xf32>
    %cst_8 = arith.constant dense<0.000000e+00> : vector<4x128xf32>
    %13 = tpu.matmul %11, %12, %cst_8 {dimension_numbers = #tpu.dot_dimension_numbers<[1], [0], [0], [1], [0, 0, 1, 1], [], []>, precision = #tpu.contract_precision<fp32>} : vector<4x128xf32>, vector<128x128xf32>, vector<4x128xf32> -> vector<4x128xf32>
    %14 = arith.mulf %0, %13 : vector<4x128xf32>
    %c0_9 = arith.constant 0 : index
    %c0_10 = arith.constant 0 : index
    %15 = vector.load %arg2[%c0_9, %c0_10] : memref<1x128xf32, #tpu.memory_space<vmem>>, vector<1x128xf32>
    %16 = vector.broadcast %15 : vector<1x128xf32> to vector<4x128xf32>
    %17 = arith.mulf %16, %14 : vector<4x128xf32>
    %c0_11 = arith.constant 0 : index
    %c0_12 = arith.constant 0 : index
    %18 = vector.load %arg5[%c0_11, %c0_12] : memref<4x128xf32, #tpu.memory_space<vmem>>, vector<4x128xf32>
    tpu.vector_store %arg5[%c0_11, %c0_12], %17 {strides = array<i32>} : memref<4x128xf32, #tpu.memory_space<vmem>>, vector<4x128xf32>,
    return
  }
  func.func @transform_0(%arg0: i32) -> (i32, i32) {
    %c0_i32 = arith.constant 0 : i32
    %c0_i32_0 = arith.constant 0 : i32
    return %arg0, %c0_i32 : i32, i32
  }
  func.func @transform_1(%arg0: i32) -> (i32, i32) {
    %c0_i32 = arith.constant 0 : i32
    %c0_i32_0 = arith.constant 0 : i32
    %c0_i32_1 = arith.constant 0 : i32
    return %c0_i32, %c0_i32_0 : i32, i32
  }
  func.func @transform_2(%arg0: i32) -> (i32, i32) {
    %c0_i32 = arith.constant 0 : i32
    %c0_i32_0 = arith.constant 0 : i32
    %c0_i32_1 = arith.constant 0 : i32
    return %c0_i32, %c0_i32_0 : i32, i32
  }
  func.func @transform_3(%arg0: i32) -> (i32, i32) {
    %c0_i32 = arith.constant 0 : i32
    %c0_i32_0 = arith.constant 0 : i32
    %c0_i32_1 = arith.constant 0 : i32
    return %c0_i32, %c0_i32_0 : i32, i32
  }
  func.func @transform_4(%arg0: i32) -> (i32, i32) {
    %c0_i32 = arith.constant 0 : i32
    %c0_i32_0 = arith.constant 0 : i32
    return %arg0, %c0_i32 : i32, i32
  }
}

</mosaic_0001>

<llo_original>
// kernel: tpu_custom_call.1
$region0: #{tpu_custom_call.1}
  #allocation0 [shape = 'u32[]', space=smem, size = 0x4, offset = 0x4, fixed_abs, tag = 'smem constant byte address 0x4 - core index']
  #allocation1 [shape = 'u32[144,128]{1,0:T(1,128)}', space=vmem, size = 0x12000, scoped, tag = 'internal scratch']
  %s0 = inlined_call_operand.hbm [shape: f32[4,128], index: 0, kind: input, shape index: {}]
  %s1 = inlined_call_operand.vmem [shape: f32[1,128], index: 1, kind: input, shape index: {}]
  %s2 = inlined_call_operand.hbm [shape: f32[128,128], index: 2, kind: input, shape index: {}]
  %s3 = inlined_call_operand.hbm [shape: f32[128,128], index: 3, kind: input, shape index: {}]
  %s4 = inlined_call_operand.hbm [shape: f32[4,128], index: 4, kind: output, shape index: {}]
  %s5 = sld [smem:[#allocation0]]
  $region38: #{tpu_custom_call.1} parent=0
    _
  %s7 = ssub.s32 1, %s5
  %s8 = scalar_select 0, %s7, %s5
  $region1: #{tpu_custom_call.1} parent=0
    #allocation2 [shape = 'u8[2048]{0}', space=vmem, size = 0x800, scoped, tag = 'input window, operand 0, single buffered']
    #allocation3 [shape = 's32[1]{0}', space=sflag, size = 0x4, scoped, tag = 'scoped memory for tpu_custom_call.1']
    #allocation4 [shape = 's32[1]{0}', space=sflag, size = 0x4, scoped, tag = 'scoped memory for tpu_custom_call.1']
    #allocation5 [shape = 'u8[65536]{0}', space=vmem, size = 0x10000, scoped, tag = 'input window, operand 2, single buffered']
    #allocation6 [shape = 's32[1]{0}', space=sflag, size = 0x4, scoped, tag = 'scoped memory for tpu_custom_call.1']
    #allocation7 [shape = 'u8[65536]{0}', space=vmem, size = 0x10000, scoped, tag = 'input window, operand 3, single buffered']
    #allocation8 [shape = 'u8[2048]{0}', space=vmem, size = 0x800, scoped, tag = 'output window, operand 0, single buffered']
    %9 = vsyncpa [#allocation3], 0
    %10 = vsyncpa [#allocation6], 0
    %11 = vsyncpa [#allocation4], 0
    // Predicated region
    $region2: #{tpu_custom_call.1} parent=1 // pred_check
      _
    $region3: #{tpu_custom_call.1} parent=1 // pred_check_branch
      %13 = sbr.rel (0) target = $region5
    $region4: #{tpu_custom_call.1} parent=1 // pred_region
      %s15 = ssub.s32 64, 64
      %16 = vsyncadd [#allocation3], %s15
      %s18 = sshll.u32 [#allocation2], 4
      %s19 = int_to_ptr.vmem [resolvable:$true] %s18
      %21 = dma.hbm_to_vmem [thread:$0]  %s0, 64, %s19, [#allocation3]
    $region5: #{tpu_custom_call.1} parent=1 // pred_fallthru
      _
    // Predicated region
    $region6: #{tpu_custom_call.1} parent=1 // pred_check
      _
    $region7: #{tpu_custom_call.1} parent=1 // pred_check_branch
      %23 = sbr.rel (0) target = $region9
    $region8: #{tpu_custom_call.1} parent=1 // pred_region
      _
    $region9: #{tpu_custom_call.1} parent=1 // pred_fallthru
      _
    // Predicated region
    $region10: #{tpu_custom_call.1} parent=1 // pred_check
      _
    $region11: #{tpu_custom_call.1} parent=1 // pred_check_branch
      %25 = sbr.rel (0) target = $region13
    $region12: #{tpu_custom_call.1} parent=1 // pred_region
      %s27 = ssub.s32 2048, 2048
      %28 = vsyncadd [#allocation6], %s27
      %s29 = sshll.u32 [#allocation5], 4
      %s30 = int_to_ptr.vmem [resolvable:$true] %s29
      %35 = dma.hbm_to_vmem [thread:$0]  %s2, 2048, %s30, [#allocation6], 128, 128, 8
    $region13: #{tpu_custom_call.1} parent=1 // pred_fallthru
      _
    // Predicated region
    $region14: #{tpu_custom_call.1} parent=1 // pred_check
      _
    $region15: #{tpu_custom_call.1} parent=1 // pred_check_branch
      %37 = sbr.rel (0) target = $region17
    $region16: #{tpu_custom_call.1} parent=1 // pred_region
      %s39 = ssub.s32 2048, 2048
      %40 = vsyncadd [#allocation6], %s39
      %s41 = sshll.u32 [#allocation7], 4
      %s42 = int_to_ptr.vmem [resolvable:$true] %s41
      %47 = dma.hbm_to_vmem [thread:$0]  %s3, 2048, %s42, [#allocation6], 128, 128, 8
    $region17: #{tpu_custom_call.1} parent=1 // pred_fallthru
      _
    // Predicated region
    $region18: #{tpu_custom_call.1} parent=1 // pred_check
      _
    $region19: #{tpu_custom_call.1} parent=1 // pred_check_branch
      %49 = sbr.rel (0) target = $region21
    $region20: #{tpu_custom_call.1} parent=1 // pred_region
      %50 = dma.done [#allocation3], 64
    $region21: #{tpu_custom_call.1} parent=1 // pred_fallthru
      _
    // Predicated region
    $region22: #{tpu_custom_call.1} parent=1 // pred_check
      _
    $region23: #{tpu_custom_call.1} parent=1 // pred_check_branch
      %52 = sbr.rel (0) target = $region25
    $region24: #{tpu_custom_call.1} parent=1 // pred_region
      %53 = dma.done [#allocation6], 2048
    $region25: #{tpu_custom_call.1} parent=1 // pred_fallthru
      _
    // Predicated region
    $region26: #{tpu_custom_call.1} parent=1 // pred_check
      _
    $region27: #{tpu_custom_call.1} parent=1 // pred_check_branch
      %55 = sbr.rel (0) target = $region29
    $region28: #{tpu_custom_call.1} parent=1 // pred_region
      %56 = dma.done [#allocation6], 2048
    $region29: #{tpu_custom_call.1} parent=1 // pred_fallthru
      _
    %v57 = vld [vmem:[#allocation2] sm:$0xf]
    %v58 = vld [vmem:[#allocation5] sm:$0xff]
    %v59 = vld [vmem:[#allocation5 + $0x8] sm:$0xff]
    %v60 = vld [vmem:[#allocation5 + $0x10] sm:$0xff]
    %v61 = vld [vmem:[#allocation5 + $0x18] sm:$0xff]
    %v62 = vld [vmem:[#allocation5 + $0x20] sm:$0xff]
    %v63 = vld [vmem:[#allocation5 + $0x28] sm:$0xff]
    %v64 = vld [vmem:[#allocation5 + $0x30] sm:$0xff]
    %v65 = vld [vmem:[#allocation5 + $0x38] sm:$0xff]
    %v66 = vld [vmem:[#allocation5 + $0x40] sm:$0xff]
    %v67 = vld [vmem:[#allocation5 + $0x48] sm:$0xff]
    %v68 = vld [vmem:[#allocation5 + $0x50] sm:$0xff]
    %v69 = vld [vmem:[#allocation5 + $0x58] sm:$0xff]
    %v70 = vld [vmem:[#allocation5 + $0x60] sm:$0xff]
    %v71 = vld [vmem:[#allocation5 + $0x68] sm:$0xff]
    %v72 = vld [vmem:[#allocation5 + $0x70] sm:$0xff]
    %v73 = vld [vmem:[#allocation5 + $0x78] sm:$0xff]
    %74 = vmatprep.subr.mxu0 0.0
    %v75 = vand.u32 %v58, 4294901760
    %76 = vmatpush1.msra.mxu0 %v75
    %77 = vmatprep.subr.mxu0 0.0
    %v78 = vand.u32 %v59, 4294901760
    %79 = vmatpush1.msra.mxu0 %v78
    %80 = vmatprep.subr.mxu0 0.0
    %v81 = vand.u32 %v60, 4294901760
    %82 = vmatpush1.msra.mxu0 %v81
    %83 = vmatprep.subr.mxu0 0.0
    %v84 = vand.u32 %v61, 4294901760
    %85 = vmatpush1.msra.mxu0 %v84
    %86 = vmatprep.subr.mxu0 0.0
    %v87 = vand.u32 %v62, 4294901760
    %88 = vmatpush1.msra.mxu0 %v87
    %89 = vmatprep.subr.mxu0 0.0
    %v90 = vand.u32 %v63, 4294901760
    %91 = vmatpush1.msra.mxu0 %v90
    %92 = vmatprep.subr.mxu0 0.0
    %v93 = vand.u32 %v64, 4294901760
    %94 = vmatpush1.msra.mxu0 %v93
    %95 = vmatprep.subr.mxu0 0.0
    %v96 = vand.u32 %v65, 4294901760
    %97 = vmatpush1.msra.mxu0 %v96
    %98 = vmatprep.subr.mxu0 0.0
    %v99 = vand.u32 %v66, 4294901760
    %100 = vmatpush1.msra.mxu0 %v99
    %101 = vmatprep.subr.mxu0 0.0
    %v102 = vand.u32 %v67, 4294901760
    %103 = vmatpush1.msra.mxu0 %v102
    %104 = vmatprep.subr.mxu0 0.0
    %v105 = vand.u32 %v68, 4294901760
    %106 = vmatpush1.msra.mxu0 %v105
    %107 = vmatprep.subr.mxu0 0.0
    %v108 = vand.u32 %v69, 4294901760
    %109 = vmatpush1.msra.mxu0 %v108
    %110 = vmatprep.subr.mxu0 0.0
    %v111 = vand.u32 %v70, 4294901760
    %112 = vmatpush1.msra.mxu0 %v111
    %113 = vmatprep.subr.mxu0 0.0
    %v114 = vand.u32 %v71, 4294901760
    %115 = vmatpush1.msra.mxu0 %v114
    %116 = vmatprep.subr.mxu0 0.0
    %v117 = vand.u32 %v72, 4294901760
    %118 = vmatpush1.msra.mxu0 %v117
    %119 = vmatprep.subr.mxu0 0.0
    %v120 = vand.u32 %v73, 4294901760
    %121 = vmatpush1.msra.mxu0 %v120
    %122 = vmatprep.subr.mxu0 0.0
    %123 = vmatpush1.msra.mxu0 0.0
    %124 = vmatprep.subr.mxu0 0.0
    %125 = vmatpush1.msra.mxu0 0.0
    %126 = vmatprep.subr.mxu0 0.0
    %127 = vmatpush1.msra.mxu0 0.0
    %128 = vmatprep.subr.mxu0 0.0
    %129 = vmatpush1.msra.mxu0 0.0
    %130 = vmatprep.subr.mxu0 0.0
    %131 = vmatpush1.msra.mxu0 0.0
    %132 = vmatprep.subr.mxu0 0.0
    %133 = vmatpush1.msra.mxu0 0.0
    %134 = vmatprep.subr.mxu0 0.0
    %135 = vmatpush1.msra.mxu0 0.0
    %136 = vmatprep.subr.mxu0 0.0
    %137 = vmatpush1.msra.mxu0 0.0
    %138 = vmatprep.subr.mxu0 0.0
    %139 = vmatpush1.msra.mxu0 0.0
    %140 = vmatprep.subr.mxu0 0.0
    %141 = vmatpush1.msra.mxu0 0.0
    %142 = vmatprep.subr.mxu0 0.0
    %143 = vmatpush1.msra.mxu0 0.0
    %144 = vmatprep.subr.mxu0 0.0
    %145 = vmatpush1.msra.mxu0 0.0
    %146 = vmatprep.subr.mxu0 0.0
    %147 = vmatpush1.msra.mxu0 0.0
    %148 = vmatprep.subr.mxu0 0.0
    %149 = vmatpush1.msra.mxu0 0.0
    %150 = vmatprep.subr.mxu0 0.0
    %151 = vmatpush1.msra.mxu0 0.0
    %152 = vmatprep.subr.mxu0 0.0
    %153 = vmatpush1.msra.mxu0 0.0
    %154 = vmatprep.mubr.f32.mxu0 0.0
    %v155 = vand.u32 %v57, 4294901760
    %v156 = vsub.f32 %v57, %v155
    %v157 = vand.u32 %v156, 4294901760
    %v158 = vsub.f32 %v156, %v157
    %v159 = vand.u32 %v158, 4294901760
    %160 = vmatmul.mubr.f32.gmra.mrb[0].mxu0 %v159
    %v161 = vpop.f32.mrb[0].mxu0
    %v162 = vadd.f32 0.0, %v161
    %v163 = vpop.f32.mrb[0].mxu0
    %164 = vdwg.mxu0
    %165 = vmatprep.subr.mxu0 0.0
    %v166 = vand.u32 %v58, 4294901760
    %v167 = vsub.f32 %v58, %v166
    %v168 = vand.u32 %v167, 4294901760
    %v169 = vsub.f32 %v167, %v168
    %v170 = vand.u32 %v169, 4294901760
    %171 = vmatpush1.msra.mxu0 %v170
    %172 = vmatprep.subr.mxu0 0.0
    %v173 = vand.u32 %v59, 4294901760
    %v174 = vsub.f32 %v59, %v173
    %v175 = vand.u32 %v174, 4294901760
    %v176 = vsub.f32 %v174, %v175
    %v177 = vand.u32 %v176, 4294901760
    %178 = vmatpush1.msra.mxu0 %v177
    %179 = vmatprep.subr.mxu0 0.0
    %v180 = vand.u32 %v60, 4294901760
    %v181 = vsub.f32 %v60, %v180
    %v182 = vand.u32 %v181, 4294901760
    %v183 = vsub.f32 %v181, %v182
    %v184 = vand.u32 %v183, 4294901760
    %185 = vmatpush1.msra.mxu0 %v184
    %186 = vmatprep.subr.mxu0 0.0
    %v187 = vand.u32 %v61, 4294901760
    %v188 = vsub.f32 %v61, %v187
    %v189 = vand.u32 %v188, 4294901760
    %v190 = vsub.f32 %v188, %v189
    %v191 = vand.u32 %v190, 4294901760
    %192 = vmatpush1.msra.mxu0 %v191
    %193 = vmatprep.subr.mxu0 0.0
    %v194 = vand.u32 %v62, 4294901760
    %v195 = vsub.f32 %v62, %v194
    %v196 = vand.u32 %v195, 4294901760
    %v197 = vsub.f32 %v195, %v196
    %v198 = vand.u32 %v197, 4294901760
    %199 = vmatpush1.msra.mxu0 %v198
    %200 = vmatprep.subr.mxu0 0.0
    %v201 = vand.u32 %v63, 4294901760
    %v202 = vsub.f32 %v63, %v201
    %v203 = vand.u32 %v202, 4294901760
    %v204 = vsub.f32 %v202, %v203
    %v205 = vand.u32 %v204, 4294901760
    %206 = vmatpush1.msra.mxu0 %v205
    %207 = vmatprep.subr.mxu0 0.0
    %v208 = vand.u32 %v64, 4294901760
    %v209 = vsub.f32 %v64, %v208
    %v210 = vand.u32 %v209, 4294901760
    %v211 = vsub.f32 %v209, %v210
    %v212 = vand.u32 %v211, 4294901760
    %213 = vmatpush1.msra.mxu0 %v212
    %214 = vmatprep.subr.mxu0 0.0
    %v215 = vand.u32 %v65, 4294901760
    %v216 = vsub.f32 %v65, %v215
    %v217 = vand.u32 %v216, 4294901760
    %v218 = vsub.f32 %v216, %v217
    %v219 = vand.u32 %v218, 4294901760
    %220 = vmatpush1.msra.mxu0 %v219
    %221 = vmatprep.subr.mxu0 0.0
    %v222 = vand.u32 %v66, 4294901760
    %v223 = vsub.f32 %v66, %v222
    %v224 = vand.u32 %v223, 4294901760
    %v225 = vsub.f32 %v223, %v224
    %v226 = vand.u32 %v225, 4294901760
    %227 = vmatpush1.msra.mxu0 %v226
    %228 = vmatprep.subr.mxu0 0.0
    %v229 = vand.u32 %v67, 4294901760
    %v230 = vsub.f32 %v67, %v229
    %v231 = vand.u32 %v230, 4294901760
    %v232 = vsub.f32 %v230, %v231
    %v233 = vand.u32 %v232, 4294901760
    %234 = vmatpush1.msra.mxu0 %v233
    %235 = vmatprep.subr.mxu0 0.0
    %v236 = vand.u32 %v68, 4294901760
    %v237 = vsub.f32 %v68, %v236
    %v238 = vand.u32 %v237, 4294901760
    %v239 = vsub.f32 %v237, %v238
    %v240 = vand.u32 %v239, 4294901760
    %241 = vmatpush1.msra.mxu0 %v240
    %242 = vmatprep.subr.mxu0 0.0
    %v243 = vand.u32 %v69, 4294901760
    %v244 = vsub.f32 %v69, %v243
    %v245 = vand.u32 %v244, 4294901760
    %v246 = vsub.f32 %v244, %v245
    %v247 = vand.u32 %v246, 4294901760
    %248 = vmatpush1.msra.mxu0 %v247
    %249 = vmatprep.subr.mxu0 0.0
    %v250 = vand.u32 %v70, 4294901760
    %v251 = vsub.f32 %v70, %v250
    %v252 = vand.u32 %v251, 4294901760
    %v253 = vsub.f32 %v251, %v252
    %v254 = vand.u32 %v253, 4294901760
    %255 = vmatpush1.msra.mxu0 %v254
    %256 = vmatprep.subr.mxu0 0.0
    %v257 = vand.u32 %v71, 4294901760
    %v258 = vsub.f32 %v71, %v257
    %v259 = vand.u32 %v258, 4294901760
    %v260 = vsub.f32 %v258, %v259
    %v261 = vand.u32 %v260, 4294901760
    %262 = vmatpush1.msra.mxu0 %v261
    %263 = vmatprep.subr.mxu0 0.0
    %v264 = vand.u32 %v72, 4294901760
    %v265 = vsub.f32 %v72, %v264
    %v266 = vand.u32 %v265, 4294901760
    %v267 = vsub.f32 %v265, %v266
    %v268 = vand.u32 %v267, 4294901760
    %269 = vmatpush1.msra.mxu0 %v268
    %270 = vmatprep.subr.mxu0 0.0
    %v271 = vand.u32 %v73, 4294901760
    %v272 = vsub.f32 %v73, %v271
    %v273 = vand.u32 %v272, 4294901760
    %v274 = vsub.f32 %v272, %v273
    %v275 = vand.u32 %v274, 4294901760
    %276 = vmatpush1.msra.mxu0 %v275
    %277 = vmatprep.subr.mxu0 0.0
    %278 = vmatpush1.msra.mxu0 0.0
    %279 = vmatprep.subr.mxu0 0.0
    %280 = vmatpush1.msra.mxu0 0.0
    %281 = vmatprep.subr.mxu0 0.0
    %282 = vmatpush1.msra.mxu0 0.0
    %283 = vmatprep.subr.mxu0 0.0
    %284 = vmatpush1.msra.mxu0 0.0
    %285 = vmatprep.subr.mxu0 0.0
    %286 = vmatpush1.msra.mxu0 0.0
    %287 = vmatprep.subr.mxu0 0.0
    %288 = vmatpush1.msra.mxu0 0.0
    %289 = vmatprep.subr.mxu0 0.0
    %290 = vmatpush1.msra.mxu0 0.0
    %291 = vmatprep.subr.mxu0 0.0
    %292 = vmatpush1.msra.mxu0 0.0
    %293 = vmatprep.subr.mxu0 0.0
    %294 = vmatpush1.msra.mxu0 0.0
    %295 = vmatprep.subr.mxu0 0.0
    %296 = vmatpush1.msra.mxu0 0.0
    %297 = vmatprep.subr.mxu0 0.0
    %298 = vmatpush1.msra.mxu0 0.0
    %299 = vmatprep.subr.mxu0 0.0
    %300 = vmatpush1.msra.mxu0 0.0
    %301 = vmatprep.subr.mxu0 0.0
    %302 = vmatpush1.msra.mxu0 0.0
    %303 = vmatprep.subr.mxu0 0.0
    %304 = vmatpush1.msra.mxu0 0.0
    %305 = vmatprep.subr.mxu0 0.0
    %306 = vmatpush1.msra.mxu0 0.0
    %307 = vmatprep.subr.mxu0 0.0
    %308 = vmatpush1.msra.mxu0 0.0
    %309 = vmatprep.mubr.f32.mxu0 0.0
    %v310 = vand.u32 %v57, 4294901760
    %311 = vmatmul.mubr.f32.gmra.mrb[0].mxu0 %v310
    %v312 = vpop.f32.mrb[0].mxu0
    %v313 = vadd.f32 %v162, %v312
    %v314 = vpop.f32.mrb[0].mxu0
    %315 = vdwg.mxu0
    %316 = vmatprep.subr.mxu0 0.0
    %v317 = vand.u32 %v58, 4294901760
    %v318 = vsub.f32 %v58, %v317
    %319 = vmatpush1.msra.mxu0 %v318
    %320 = vmatprep.subr.mxu0 0.0
    %v321 = vand.u32 %v59, 4294901760
    %v322 = vsub.f32 %v59, %v321
    %323 = vmatpush1.msra.mxu0 %v322
    %324 = vmatprep.subr.mxu0 0.0
    %v325 = vand.u32 %v60, 4294901760
    %v326 = vsub.f32 %v60, %v325
    %327 = vmatpush1.msra.mxu0 %v326
    %328 = vmatprep.subr.mxu0 0.0
    %v329 = vand.u32 %v61, 4294901760
    %v330 = vsub.f32 %v61, %v329
    %331 = vmatpush1.msra.mxu0 %v330
    %332 = vmatprep.subr.mxu0 0.0
    %v333 = vand.u32 %v62, 4294901760
    %v334 = vsub.f32 %v62, %v333
    %335 = vmatpush1.msra.mxu0 %v334
    %336 = vmatprep.subr.mxu0 0.0
    %v337 = vand.u32 %v63, 4294901760
    %v338 = vsub.f32 %v63, %v337
    %339 = vmatpush1.msra.mxu0 %v338
    %340 = vmatprep.subr.mxu0 0.0
    %v341 = vand.u32 %v64, 4294901760
    %v342 = vsub.f32 %v64, %v341
    %343 = vmatpush1.msra.mxu0 %v342
    %344 = vmatprep.subr.mxu0 0.0
    %v345 = vand.u32 %v65, 4294901760
    %v346 = vsub.f32 %v65, %v345
    %347 = vmatpush1.msra.mxu0 %v346
    %348 = vmatprep.subr.mxu0 0.0
    %v349 = vand.u32 %v66, 4294901760
    %v350 = vsub.f32 %v66, %v349
    %351 = vmatpush1.msra.mxu0 %v350
    %352 = vmatprep.subr.mxu0 0.0
    %v353 = vand.u32 %v67, 4294901760
    %v354 = vsub.f32 %v67, %v353
    %355 = vmatpush1.msra.mxu0 %v354
    %356 = vmatprep.subr.mxu0 0.0
    %v357 = vand.u32 %v68, 4294901760
    %v358 = vsub.f32 %v68, %v357
    %359 = vmatpush1.msra.mxu0 %v358
    %360 = vmatprep.subr.mxu0 0.0
    %v361 = vand.u32 %v69, 4294901760
    %v362 = vsub.f32 %v69, %v361
    %363 = vmatpush1.msra.mxu0 %v362
    %364 = vmatprep.subr.mxu0 0.0
    %v365 = vand.u32 %v70, 4294901760
    %v366 = vsub.f32 %v70, %v365
    %367 = vmatpush1.msra.mxu0 %v366
    %368 = vmatprep.subr.mxu0 0.0
    %v369 = vand.u32 %v71, 4294901760
    %v370 = vsub.f32 %v71, %v369
    %371 = vmatpush1.msra.mxu0 %v370
    %372 = vmatprep.subr.mxu0 0.0
    %v373 = vand.u32 %v72, 4294901760
    %v374 = vsub.f32 %v72, %v373
    %375 = vmatpush1.msra.mxu0 %v374
    %376 = vmatprep.subr.mxu0 0.0
    %v377 = vand.u32 %v73, 4294901760
    %v378 = vsub.f32 %v73, %v377
    %379 = vmatpush1.msra.mxu0 %v378
    %380 = vmatprep.subr.mxu0 0.0
    %381 = vmatpush1.msra.mxu0 0.0
    %382 = vmatprep.subr.mxu0 0.0
    %383 = vmatpush1.msra.mxu0 0.0
    %384 = vmatprep.subr.mxu0 0.0
    %385 = vmatpush1.msra.mxu0 0.0
    %386 = vmatprep.subr.mxu0 0.0
    %387 = vmatpush1.msra.mxu0 0.0
    %388 = vmatprep.subr.mxu0 0.0
    %389 = vmatpush1.msra.mxu0 0.0
    %390 = vmatprep.subr.mxu0 0.0
    %391 = vmatpush1.msra.mxu0 0.0
    %392 = vmatprep.subr.mxu0 0.0
    %393 = vmatpush1.msra.mxu0 0.0
    %394 = vmatprep.subr.mxu0 0.0
    %395 = vmatpush1.msra.mxu0 0.0
    %396 = vmatprep.subr.mxu0 0.0
    %397 = vmatpush1.msra.mxu0 0.0
    %398 = vmatprep.subr.mxu0 0.0
    %399 = vmatpush1.msra.mxu0 0.0
    %400 = vmatprep.subr.mxu0 0.0
    %401 = vmatpush1.msra.mxu0 0.0
    %402 = vmatprep.subr.mxu0 0.0
    %403 = vmatpush1.msra.mxu0 0.0
    %404 = vmatprep.subr.mxu0 0.0
    %405 = vmatpush1.msra.mxu0 0.0
    %406 = vmatprep.subr.mxu0 0.0
    %407 = vmatpush1.msra.mxu0 0.0
    %408 = vmatprep.subr.mxu0 0.0
    %409 = vmatpush1.msra.mxu0 0.0
    %410 = vmatprep.subr.mxu0 0.0
    %411 = vmatpush1.msra.mxu0 0.0
    %412 = vmatprep.mubr.f32.mxu0 0.0
    %v413 = vand.u32 %v57, 4294901760
    %v414 = vsub.f32 %v57, %v413
    %415 = vmatmul.mubr.f32.gmra.mrb[0].mxu0 %v414
    %v416 = vpop.f32.mrb[0].mxu0
    %v417 = vadd.f32 %v313, %v416
    %v418 = vpop.f32.mrb[0].mxu0
    %419 = vdwg.mxu0
    %420 = vmatprep.subr.mxu0 0.0
    %v421 = vand.u32 %v58, 4294901760
    %422 = vmatpush1.msra.mxu0 %v421
    %423 = vmatprep.subr.mxu0 0.0
    %v424 = vand.u32 %v59, 4294901760
    %425 = vmatpush1.msra.mxu0 %v424
    %426 = vmatprep.subr.mxu0 0.0
    %v427 = vand.u32 %v60, 4294901760
    %428 = vmatpush1.msra.mxu0 %v427
    %429 = vmatprep.subr.mxu0 0.0
    %v430 = vand.u32 %v61, 4294901760
    %431 = vmatpush1.msra.mxu0 %v430
    %432 = vmatprep.subr.mxu0 0.0
    %v433 = vand.u32 %v62, 4294901760
    %434 = vmatpush1.msra.mxu0 %v433
    %435 = vmatprep.subr.mxu0 0.0
    %v436 = vand.u32 %v63, 4294901760
    %437 = vmatpush1.msra.mxu0 %v436
    %438 = vmatprep.subr.mxu0 0.0
    %v439 = vand.u32 %v64, 4294901760
    %440 = vmatpush1.msra.mxu0 %v439
    %441 = vmatprep.subr.mxu0 0.0
    %v442 = vand.u32 %v65, 4294901760
    %443 = vmatpush1.msra.mxu0 %v442
    %444 = vmatprep.subr.mxu0 0.0
    %v445 = vand.u32 %v66, 4294901760
    %446 = vmatpush1.msra.mxu0 %v445
    %447 = vmatprep.subr.mxu0 0.0
    %v448 = vand.u32 %v67, 4294901760
    %449 = vmatpush1.msra.mxu0 %v448
    %450 = vmatprep.subr.mxu0 0.0
    %v451 = vand.u32 %v68, 4294901760
    %452 = vmatpush1.msra.mxu0 %v451
    %453 = vmatprep.subr.mxu0 0.0
    %v454 = vand.u32 %v69, 4294901760
    %455 = vmatpush1.msra.mxu0 %v454
    %456 = vmatprep.subr.mxu0 0.0
    %v457 = vand.u32 %v70, 4294901760
    %458 = vmatpush1.msra.mxu0 %v457
    %459 = vmatprep.subr.mxu0 0.0
    %v460 = vand.u32 %v71, 4294901760
    %461 = vmatpush1.msra.mxu0 %v460
    %462 = vmatprep.subr.mxu0 0.0
    %v463 = vand.u32 %v72, 4294901760
    %464 = vmatpush1.msra.mxu0 %v463
    %465 = vmatprep.subr.mxu0 0.0
    %v466 = vand.u32 %v73, 4294901760
    %467 = vmatpush1.msra.mxu0 %v466
    %468 = vmatprep.subr.mxu0 0.0
    %469 = vmatpush1.msra.mxu0 0.0
    %470 = vmatprep.subr.mxu0 0.0
    %471 = vmatpush1.msra.mxu0 0.0
    %472 = vmatprep.subr.mxu0 0.0
    %473 = vmatpush1.msra.mxu0 0.0
    %474 = vmatprep.subr.mxu0 0.0
    %475 = vmatpush1.msra.mxu0 0.0
    %476 = vmatprep.subr.mxu0 0.0
    %477 = vmatpush1.msra.mxu0 0.0
    %478 = vmatprep.subr.mxu0 0.0
    %479 = vmatpush1.msra.mxu0 0.0
    %480 = vmatprep.subr.mxu0 0.0
    %481 = vmatpush1.msra.mxu0 0.0
    %482 = vmatprep.subr.mxu0 0.0
    %483 = vmatpush1.msra.mxu0 0.0
    %484 = vmatprep.subr.mxu0 0.0
    %485 = vmatpush1.msra.mxu0 0.0
    %486 = vmatprep.subr.mxu0 0.0
    %487 = vmatpush1.msra.mxu0 0.0
    %488 = vmatprep.subr.mxu0 0.0
    %489 = vmatpush1.msra.mxu0 0.0
    %490 = vmatprep.subr.mxu0 0.0
    %491 = vmatpush1.msra.mxu0 0.0
    %492 = vmatprep.subr.mxu0 0.0
    %493 = vmatpush1.msra.mxu0 0.0
    %494 = vmatprep.subr.mxu0 0.0
    %495 = vmatpush1.msra.mxu0 0.0
    %496 = vmatprep.subr.mxu0 0.0
    %497 = vmatpush1.msra.mxu0 0.0
    %498 = vmatprep.subr.mxu0 0.0
    %499 = vmatpush1.msra.mxu0 0.0
    %500 = vmatprep.mubr.f32.mxu0 0.0
    %v501 = vand.u32 %v57, 4294901760
    %v502 = vsub.f32 %v57, %v501
    %v503 = vand.u32 %v502, 4294901760
    %504 = vmatmul.mubr.f32.gmra.mrb[0].mxu0 %v503
    %v505 = vpop.f32.mrb[0].mxu0
    %v506 = vadd.f32 %v417, %v505
    %v507 = vpop.f32.mrb[0].mxu0
    %508 = vdwg.mxu0
    %509 = vmatprep.subr.mxu0 0.0
    %v510 = vand.u32 %v58, 4294901760
    %v511 = vsub.f32 %v58, %v510
    %v512 = vand.u32 %v511, 4294901760
    %513 = vmatpush1.msra.mxu0 %v512
    %514 = vmatprep.subr.mxu0 0.0
    %v515 = vand.u32 %v59, 4294901760
    %v516 = vsub.f32 %v59, %v515
    %v517 = vand.u32 %v516, 4294901760
    %518 = vmatpush1.msra.mxu0 %v517
    %519 = vmatprep.subr.mxu0 0.0
    %v520 = vand.u32 %v60, 4294901760
    %v521 = vsub.f32 %v60, %v520
    %v522 = vand.u32 %v521, 4294901760
    %523 = vmatpush1.msra.mxu0 %v522
    %524 = vmatprep.subr.mxu0 0.0
    %v525 = vand.u32 %v61, 4294901760
    %v526 = vsub.f32 %v61, %v525
    %v527 = vand.u32 %v526, 4294901760
    %528 = vmatpush1.msra.mxu0 %v527
    %529 = vmatprep.subr.mxu0 0.0
    %v530 = vand.u32 %v62, 4294901760
    %v531 = vsub.f32 %v62, %v530
    %v532 = vand.u32 %v531, 4294901760
    %533 = vmatpush1.msra.mxu0 %v532
    %534 = vmatprep.subr.mxu0 0.0
    %v535 = vand.u32 %v63, 4294901760
    %v536 = vsub.f32 %v63, %v535
    %v537 = vand.u32 %v536, 4294901760
    %538 = vmatpush1.msra.mxu0 %v537
    %539 = vmatprep.subr.mxu0 0.0
    %v540 = vand.u32 %v64, 4294901760
    %v541 = vsub.f32 %v64, %v540
    %v542 = vand.u32 %v541, 4294901760
    %543 = vmatpush1.msra.mxu0 %v542
    %544 = vmatprep.subr.mxu0 0.0
    %v545 = vand.u32 %v65, 4294901760
    %v546 = vsub.f32 %v65, %v545
    %v547 = vand.u32 %v546, 4294901760
    %548 = vmatpush1.msra.mxu0 %v547
    %549 = vmatprep.subr.mxu0 0.0
    %v550 = vand.u32 %v66, 4294901760
    %v551 = vsub.f32 %v66, %v550
    %v552 = vand.u32 %v551, 4294901760
    %553 = vmatpush1.msra.mxu0 %v552
    %554 = vmatprep.subr.mxu0 0.0
    %v555 = vand.u32 %v67, 4294901760
    %v556 = vsub.f32 %v67, %v555
    %v557 = vand.u32 %v556, 4294901760
    %558 = vmatpush1.msra.mxu0 %v557
    %559 = vmatprep.subr.mxu0 0.0
    %v560 = vand.u32 %v68, 4294901760
    %v561 = vsub.f32 %v68, %v560
    %v562 = vand.u32 %v561, 4294901760
    %563 = vmatpush1.msra.mxu0 %v562
    %564 = vmatprep.subr.mxu0 0.0
    %v565 = vand.u32 %v69, 4294901760
    %v566 = vsub.f32 %v69, %v565
    %v567 = vand.u32 %v566, 4294901760
    %568 = vmatpush1.msra.mxu0 %v567
    %569 = vmatprep.subr.mxu0 0.0
    %v570 = vand.u32 %v70, 4294901760
    %v571 = vsub.f32 %v70, %v570
    %v572 = vand.u32 %v571, 4294901760
    %573 = vmatpush1.msra.mxu0 %v572
    %574 = vmatprep.subr.mxu0 0.0
    %v575 = vand.u32 %v71, 4294901760
    %v576 = vsub.f32 %v71, %v575
    %v577 = vand.u32 %v576, 4294901760
    %578 = vmatpush1.msra.mxu0 %v577
    %579 = vmatprep.subr.mxu0 0.0
    %v580 = vand.u32 %v72, 4294901760
    %v581 = vsub.f32 %v72, %v580
    %v582 = vand.u32 %v581, 4294901760
    %583 = vmatpush1.msra.mxu0 %v582
    %584 = vmatprep.subr.mxu0 0.0
    %v585 = vand.u32 %v73, 4294901760
    %v586 = vsub.f32 %v73, %v585
    %v587 = vand.u32 %v586, 4294901760
    %588 = vmatpush1.msra.mxu0 %v587
    %589 = vmatprep.subr.mxu0 0.0
    %590 = vmatpush1.msra.mxu0 0.0
    %591 = vmatprep.subr.mxu0 0.0
    %592 = vmatpush1.msra.mxu0 0.0
    %593 = vmatprep.subr.mxu0 0.0
    %594 = vmatpush1.msra.mxu0 0.0
    %595 = vmatprep.subr.mxu0 0.0
    %596 = vmatpush1.msra.mxu0 0.0
    %597 = vmatprep.subr.mxu0 0.0
    %598 = vmatpush1.msra.mxu0 0.0
    %599 = vmatprep.subr.mxu0 0.0
    %600 = vmatpush1.msra.mxu0 0.0
    %601 = vmatprep.subr.mxu0 0.0
    %602 = vmatpush1.msra.mxu0 0.0
    %603 = vmatprep.subr.mxu0 0.0
    %604 = vmatpush1.msra.mxu0 0.0
    %605 = vmatprep.subr.mxu0 0.0
    %606 = vmatpush1.msra.mxu0 0.0
    %607 = vmatprep.subr.mxu0 0.0
    %608 = vmatpush1.msra.mxu0 0.0
    %609 = vmatprep.subr.mxu0 0.0
    %610 = vmatpush1.msra.mxu0 0.0
    %611 = vmatprep.subr.mxu0 0.0
    %612 = vmatpush1.msra.mxu0 0.0
    %613 = vmatprep.subr.mxu0 0.0
    %614 = vmatpush1.msra.mxu0 0.0
    %615 = vmatprep.subr.mxu0 0.0
    %616 = vmatpush1.msra.mxu0 0.0
    %617 = vmatprep.subr.mxu0 0.0
    %618 = vmatpush1.msra.mxu0 0.0
    %619 = vmatprep.subr.mxu0 0.0
    %620 = vmatpush1.msra.mxu0 0.0
    %621 = vmatprep.mubr.f32.mxu0 0.0
    %v622 = vand.u32 %v57, 4294901760
    %623 = vmatmul.mubr.f32.gmra.mrb[0].mxu0 %v622
    %v624 = vpop.f32.mrb[0].mxu0
    %v625 = vadd.f32 %v506, %v624
    %v626 = vpop.f32.mrb[0].mxu0
    %627 = vdwg.mxu0
    %628 = vmatprep.subr.mxu0 0.0
    %v629 = vand.u32 %v58, 4294901760
    %630 = vmatpush1.msra.mxu0 %v629
    %631 = vmatprep.subr.mxu0 0.0
    %v632 = vand.u32 %v59, 4294901760
    %633 = vmatpush1.msra.mxu0 %v632
    %634 = vmatprep.subr.mxu0 0.0
    %v635 = vand.u32 %v60, 4294901760
    %636 = vmatpush1.msra.mxu0 %v635
    %637 = vmatprep.subr.mxu0 0.0
    %v638 = vand.u32 %v61, 4294901760
    %639 = vmatpush1.msra.mxu0 %v638
    %640 = vmatprep.subr.mxu0 0.0
    %v641 = vand.u32 %v62, 4294901760
    %642 = vmatpush1.msra.mxu0 %v641
    %643 = vmatprep.subr.mxu0 0.0
    %v644 = vand.u32 %v63, 4294901760
    %645 = vmatpush1.msra.mxu0 %v644
    %646 = vmatprep.subr.mxu0 0.0
    %v647 = vand.u32 %v64, 4294901760
    %648 = vmatpush1.msra.mxu0 %v647
    %649 = vmatprep.subr.mxu0 0.0
    %v650 = vand.u32 %v65, 4294901760
    %651 = vmatpush1.msra.mxu0 %v650
    %652 = vmatprep.subr.mxu0 0.0
    %v653 = vand.u32 %v66, 4294901760
    %654 = vmatpush1.msra.mxu0 %v653
    %655 = vmatprep.subr.mxu0 0.0
    %v656 = vand.u32 %v67, 4294901760
    %657 = vmatpush1.msra.mxu0 %v656
    %658 = vmatprep.subr.mxu0 0.0
    %v659 = vand.u32 %v68, 4294901760
    %660 = vmatpush1.msra.mxu0 %v659
    %661 = vmatprep.subr.mxu0 0.0
    %v662 = vand.u32 %v69, 4294901760
    %663 = vmatpush1.msra.mxu0 %v662
    %664 = vmatprep.subr.mxu0 0.0
    %v665 = vand.u32 %v70, 4294901760
    %666 = vmatpush1.msra.mxu0 %v665
    %667 = vmatprep.subr.mxu0 0.0
    %v668 = vand.u32 %v71, 4294901760
    %669 = vmatpush1.msra.mxu0 %v668
    %670 = vmatprep.subr.mxu0 0.0
    %v671 = vand.u32 %v72, 4294901760
    %672 = vmatpush1.msra.mxu0 %v671
    %673 = vmatprep.subr.mxu0 0.0
    %v674 = vand.u32 %v73, 4294901760
    %675 = vmatpush1.msra.mxu0 %v674
    %676 = vmatprep.subr.mxu0 0.0
    %677 = vmatpush1.msra.mxu0 0.0
    %678 = vmatprep.subr.mxu0 0.0
    %679 = vmatpush1.msra.mxu0 0.0
    %680 = vmatprep.subr.mxu0 0.0
    %681 = vmatpush1.msra.mxu0 0.0
    %682 = vmatprep.subr.mxu0 0.0
    %683 = vmatpush1.msra.mxu0 0.0
    %684 = vmatprep.subr.mxu0 0.0
    %685 = vmatpush1.msra.mxu0 0.0
    %686 = vmatprep.subr.mxu0 0.0
    %687 = vmatpush1.msra.mxu0 0.0
    %688 = vmatprep.subr.mxu0 0.0
    %689 = vmatpush1.msra.mxu0 0.0
    %690 = vmatprep.subr.mxu0 0.0
    %691 = vmatpush1.msra.mxu0 0.0
    %692 = vmatprep.subr.mxu0 0.0
    %693 = vmatpush1.msra.mxu0 0.0
    %694 = vmatprep.subr.mxu0 0.0
    %695 = vmatpush1.msra.mxu0 0.0
    %696 = vmatprep.subr.mxu0 0.0
    %697 = vmatpush1.msra.mxu0 0.0
    %698 = vmatprep.subr.mxu0 0.0
    %699 = vmatpush1.msra.mxu0 0.0
    %700 = vmatprep.subr.mxu0 0.0
    %701 = vmatpush1.msra.mxu0 0.0
    %702 = vmatprep.subr.mxu0 0.0
    %703 = vmatpush1.msra.mxu0 0.0
    %704 = vmatprep.subr.mxu0 0.0
    %705 = vmatpush1.msra.mxu0 0.0
    %706 = vmatprep.subr.mxu0 0.0
    %707 = vmatpush1.msra.mxu0 0.0
    %708 = vmatprep.mubr.f32.mxu0 0.0
    %v709 = vand.u32 %v57, 4294901760
    %710 = vmatmul.mubr.f32.gmra.mrb[0].mxu0 %v709
    %v711 = vpop.f32.mrb[0].mxu0
    %v712 = vadd.f32 %v625, %v711
    %v713 = vpop.f32.mrb[0].mxu0
    %714 = vdwg.mxu0
    %v715 = vmul.f32 %v57, %v57
    %v716 = vmul.f32 %v712, %v712
    %717 = vmatprep.subr.mxu0 0.0
    %v718 = vand.u32 %v58, 4294901760
    %719 = vmatpush1.msra.mxu0 %v718
    %720 = vmatprep.subr.mxu0 0.0
    %v721 = vand.u32 %v59, 4294901760
    %722 = vmatpush1.msra.mxu0 %v721
    %723 = vmatprep.subr.mxu0 0.0
    %v724 = vand.u32 %v60, 4294901760
    %725 = vmatpush1.msra.mxu0 %v724
    %726 = vmatprep.subr.mxu0 0.0
    %v727 = vand.u32 %v61, 4294901760
    %728 = vmatpush1.msra.mxu0 %v727
    %729 = vmatprep.subr.mxu0 0.0
    %v730 = vand.u32 %v62, 4294901760
    %731 = vmatpush1.msra.mxu0 %v730
    %732 = vmatprep.subr.mxu0 0.0
    %v733 = vand.u32 %v63, 4294901760
    %734 = vmatpush1.msra.mxu0 %v733
    %735 = vmatprep.subr.mxu0 0.0
    %v736 = vand.u32 %v64, 4294901760
    %737 = vmatpush1.msra.mxu0 %v736
    %738 = vmatprep.subr.mxu0 0.0
    %v739 = vand.u32 %v65, 4294901760
    %740 = vmatpush1.msra.mxu0 %v739
    %741 = vmatprep.subr.mxu0 0.0
    %v742 = vand.u32 %v66, 4294901760
    %743 = vmatpush1.msra.mxu0 %v742
    %744 = vmatprep.subr.mxu0 0.0
    %v745 = vand.u32 %v67, 4294901760
    %746 = vmatpush1.msra.mxu0 %v745
    %747 = vmatprep.subr.mxu0 0.0
    %v748 = vand.u32 %v68, 4294901760
    %749 = vmatpush1.msra.mxu0 %v748
    %750 = vmatprep.subr.mxu0 0.0
    %v751 = vand.u32 %v69, 4294901760
    %752 = vmatpush1.msra.mxu0 %v751
    %753 = vmatprep.subr.mxu0 0.0
    %v754 = vand.u32 %v70, 4294901760
    %755 = vmatpush1.msra.mxu0 %v754
    %756 = vmatprep.subr.mxu0 0.0
    %v757 = vand.u32 %v71, 4294901760
    %758 = vmatpush1.msra.mxu0 %v757
    %759 = vmatprep.subr.mxu0 0.0
    %v760 = vand.u32 %v72, 4294901760
    %761 = vmatpush1.msra.mxu0 %v760
    %762 = vmatprep.subr.mxu0 0.0
    %v763 = vand.u32 %v73, 4294901760
    %764 = vmatpush1.msra.mxu0 %v763
    %765 = vmatprep.subr.mxu0 0.0
    %766 = vmatpush1.msra.mxu0 0.0
    %767 = vmatprep.subr.mxu0 0.0
    %768 = vmatpush1.msra.mxu0 0.0
    %769 = vmatprep.subr.mxu0 0.0
    %770 = vmatpush1.msra.mxu0 0.0
    %771 = vmatprep.subr.mxu0 0.0
    %772 = vmatpush1.msra.mxu0 0.0
    %773 = vmatprep.subr.mxu0 0.0
    %774 = vmatpush1.msra.mxu0 0.0
    %775 = vmatprep.subr.mxu0 0.0
    %776 = vmatpush1.msra.mxu0 0.0
    %777 = vmatprep.subr.mxu0 0.0
    %778 = vmatpush1.msra.mxu0 0.0
    %779 = vmatprep.subr.mxu0 0.0
    %780 = vmatpush1.msra.mxu0 0.0
    %781 = vmatprep.subr.mxu0 0.0
    %782 = vmatpush1.msra.mxu0 0.0
    %783 = vmatprep.subr.mxu0 0.0
    %784 = vmatpush1.msra.mxu0 0.0
    %785 = vmatprep.subr.mxu0 0.0
    %786 = vmatpush1.msra.mxu0 0.0
    %787 = vmatprep.subr.mxu0 0.0
    %788 = vmatpush1.msra.mxu0 0.0
    %789 = vmatprep.subr.mxu0 0.0
    %790 = vmatpush1.msra.mxu0 0.0
    %791 = vmatprep.subr.mxu0 0.0
    %792 = vmatpush1.msra.mxu0 0.0
    %793 = vmatprep.subr.mxu0 0.0
    %794 = vmatpush1.msra.mxu0 0.0
    %795 = vmatprep.subr.mxu0 0.0
    %796 = vmatpush1.msra.mxu0 0.0
    %797 = vmatprep.mubr.f32.mxu0 0.0
    %v798 = vand.u32 %v715, 4294901760
    %v799 = vsub.f32 %v715, %v798
    %v800 = vand.u32 %v799, 4294901760
    %v801 = vsub.f32 %v799, %v800
    %v802 = vand.u32 %v801, 4294901760
    %803 = vmatmul.mubr.f32.gmra.mrb[0].mxu0 %v802
    %v804 = vpop.f32.mrb[0].mxu0
    %v805 = vadd.f32 %v716, %v804
    %v806 = vpop.f32.mrb[0].mxu0
    %807 = vdwg.mxu0
    %808 = vmatprep.subr.mxu0 0.0
    %v809 = vand.u32 %v58, 4294901760
    %v810 = vsub.f32 %v58, %v809
    %v811 = vand.u32 %v810, 4294901760
    %v812 = vsub.f32 %v810, %v811
    %v813 = vand.u32 %v812, 4294901760
    %814 = vmatpush1.msra.mxu0 %v813
    %815 = vmatprep.subr.mxu0 0.0
    %v816 = vand.u32 %v59, 4294901760
    %v817 = vsub.f32 %v59, %v816
    %v818 = vand.u32 %v817, 4294901760
    %v819 = vsub.f32 %v817, %v818
    %v820 = vand.u32 %v819, 4294901760
    %821 = vmatpush1.msra.mxu0 %v820
    %822 = vmatprep.subr.mxu0 0.0
    %v823 = vand.u32 %v60, 4294901760
    %v824 = vsub.f32 %v60, %v823
    %v825 = vand.u32 %v824, 4294901760
    %v826 = vsub.f32 %v824, %v825
    %v827 = vand.u32 %v826, 4294901760
    %828 = vmatpush1.msra.mxu0 %v827
    %829 = vmatprep.subr.mxu0 0.0
    %v830 = vand.u32 %v61, 4294901760
    %v831 = vsub.f32 %v61, %v830
    %v832 = vand.u32 %v831, 4294901760
    %v833 = vsub.f32 %v831, %v832
    %v834 = vand.u32 %v833, 4294901760
    %835 = vmatpush1.msra.mxu0 %v834
    %836 = vmatprep.subr.mxu0 0.0
    %v837 = vand.u32 %v62, 4294901760
    %v838 = vsub.f32 %v62, %v837
    %v839 = vand.u32 %v838, 4294901760
    %v840 = vsub.f32 %v838, %v839
    %v841 = vand.u32 %v840, 4294901760
    %842 = vmatpush1.msra.mxu0 %v841
    %843 = vmatprep.subr.mxu0 0.0
    %v844 = vand.u32 %v63, 4294901760
    %v845 = vsub.f32 %v63, %v844
    %v846 = vand.u32 %v845, 4294901760
    %v847 = vsub.f32 %v845, %v846
    %v848 = vand.u32 %v847, 4294901760
    %849 = vmatpush1.msra.mxu0 %v848
    %850 = vmatprep.subr.mxu0 0.0
    %v851 = vand.u32 %v64, 4294901760
    %v852 = vsub.f32 %v64, %v851
    %v853 = vand.u32 %v852, 4294901760
    %v854 = vsub.f32 %v852, %v853
    %v855 = vand.u32 %v854, 4294901760
    %856 = vmatpush1.msra.mxu0 %v855
    %857 = vmatprep.subr.mxu0 0.0
    %v858 = vand.u32 %v65, 4294901760
    %v859 = vsub.f32 %v65, %v858
    %v860 = vand.u32 %v859, 4294901760
    %v861 = vsub.f32 %v859, %v860
    %v862 = vand.u32 %v861, 4294901760
    %863 = vmatpush1.msra.mxu0 %v862
    %864 = vmatprep.subr.mxu0 0.0
    %v865 = vand.u32 %v66, 4294901760
    %v866 = vsub.f32 %v66, %v865
    %v867 = vand.u32 %v866, 4294901760
    %v868 = vsub.f32 %v866, %v867
    %v869 = vand.u32 %v868, 4294901760
    %870 = vmatpush1.msra.mxu0 %v869
    %871 = vmatprep.subr.mxu0 0.0
    %v872 = vand.u32 %v67, 4294901760
    %v873 = vsub.f32 %v67, %v872
    %v874 = vand.u32 %v873, 4294901760
    %v875 = vsub.f32 %v873, %v874
    %v876 = vand.u32 %v875, 4294901760
    %877 = vmatpush1.msra.mxu0 %v876
    %878 = vmatprep.subr.mxu0 0.0
    %v879 = vand.u32 %v68, 4294901760
    %v880 = vsub.f32 %v68, %v879
    %v881 = vand.u32 %v880, 4294901760
    %v882 = vsub.f32 %v880, %v881
    %v883 = vand.u32 %v882, 4294901760
    %884 = vmatpush1.msra.mxu0 %v883
    %885 = vmatprep.subr.mxu0 0.0
    %v886 = vand.u32 %v69, 4294901760
    %v887 = vsub.f32 %v69, %v886
    %v888 = vand.u32 %v887, 4294901760
    %v889 = vsub.f32 %v887, %v888
    %v890 = vand.u32 %v889, 4294901760
    %891 = vmatpush1.msra.mxu0 %v890
    %892 = vmatprep.subr.mxu0 0.0
    %v893 = vand.u32 %v70, 4294901760
    %v894 = vsub.f32 %v70, %v893
    %v895 = vand.u32 %v894, 4294901760
    %v896 = vsub.f32 %v894, %v895
    %v897 = vand.u32 %v896, 4294901760
    %898 = vmatpush1.msra.mxu0 %v897
    %899 = vmatprep.subr.mxu0 0.0
    %v900 = vand.u32 %v71, 4294901760
    %v901 = vsub.f32 %v71, %v900
    %v902 = vand.u32 %v901, 4294901760
    %v903 = vsub.f32 %v901, %v902
    %v904 = vand.u32 %v903, 4294901760
    %905 = vmatpush1.msra.mxu0 %v904
    %906 = vmatprep.subr.mxu0 0.0
    %v907 = vand.u32 %v72, 4294901760
    %v908 = vsub.f32 %v72, %v907
    %v909 = vand.u32 %v908, 4294901760
    %v910 = vsub.f32 %v908, %v909
    %v911 = vand.u32 %v910, 4294901760
    %912 = vmatpush1.msra.mxu0 %v911
    %913 = vmatprep.subr.mxu0 0.0
    %v914 = vand.u32 %v73, 4294901760
    %v915 = vsub.f32 %v73, %v914
    %v916 = vand.u32 %v915, 4294901760
    %v917 = vsub.f32 %v915, %v916
    %v918 = vand.u32 %v917, 4294901760
    %919 = vmatpush1.msra.mxu0 %v918
    %920 = vmatprep.subr.mxu0 0.0
    %921 = vmatpush1.msra.mxu0 0.0
    %922 = vmatprep.subr.mxu0 0.0
    %923 = vmatpush1.msra.mxu0 0.0
    %924 = vmatprep.subr.mxu0 0.0
    %925 = vmatpush1.msra.mxu0 0.0
    %926 = vmatprep.subr.mxu0 0.0
    %927 = vmatpush1.msra.mxu0 0.0
    %928 = vmatprep.subr.mxu0 0.0
    %929 = vmatpush1.msra.mxu0 0.0
    %930 = vmatprep.subr.mxu0 0.0
    %931 = vmatpush1.msra.mxu0 0.0
    %932 = vmatprep.subr.mxu0 0.0
    %933 = vmatpush1.msra.mxu0 0.0
    %934 = vmatprep.subr.mxu0 0.0
    %935 = vmatpush1.msra.mxu0 0.0
    %936 = vmatprep.subr.mxu0 0.0
    %937 = vmatpush1.msra.mxu0 0.0
    %938 = vmatprep.subr.mxu0 0.0
    %939 = vmatpush1.msra.mxu0 0.0
    %940 = vmatprep.subr.mxu0 0.0
    %941 = vmatpush1.msra.mxu0 0.0
    %942 = vmatprep.subr.mxu0 0.0
    %943 = vmatpush1.msra.mxu0 0.0
    %944 = vmatprep.subr.mxu0 0.0
    %945 = vmatpush1.msra.mxu0 0.0
    %946 = vmatprep.subr.mxu0 0.0
    %947 = vmatpush1.msra.mxu0 0.0
    %948 = vmatprep.subr.mxu0 0.0
    %949 = vmatpush1.msra.mxu0 0.0
    %950 = vmatprep.subr.mxu0 0.0
    %951 = vmatpush1.msra.mxu0 0.0
    %952 = vmatprep.mubr.f32.mxu0 0.0
    %v953 = vand.u32 %v715, 4294901760
    %954 = vmatmul.mubr.f32.gmra.mrb[0].mxu0 %v953
    %v955 = vpop.f32.mrb[0].mxu0
    %v956 = vadd.f32 %v805, %v955
    %v957 = vpop.f32.mrb[0].mxu0
    %958 = vdwg.mxu0
    %959 = vmatprep.subr.mxu0 0.0
    %v960 = vand.u32 %v58, 4294901760
    %v961 = vsub.f32 %v58, %v960
    %962 = vmatpush1.msra.mxu0 %v961
    %963 = vmatprep.subr.mxu0 0.0
    %v964 = vand.u32 %v59, 4294901760
    %v965 = vsub.f32 %v59, %v964
    %966 = vmatpush1.msra.mxu0 %v965
    %967 = vmatprep.subr.mxu0 0.0
    %v968 = vand.u32 %v60, 4294901760
    %v969 = vsub.f32 %v60, %v968
    %970 = vmatpush1.msra.mxu0 %v969
    %971 = vmatprep.subr.mxu0 0.0
    %v972 = vand.u32 %v61, 4294901760
    %v973 = vsub.f32 %v61, %v972
    %974 = vmatpush1.msra.mxu0 %v973
    %975 = vmatprep.subr.mxu0 0.0
    %v976 = vand.u32 %v62, 4294901760
    %v977 = vsub.f32 %v62, %v976
    %978 = vmatpush1.msra.mxu0 %v977
    %979 = vmatprep.subr.mxu0 0.0
    %v980 = vand.u32 %v63, 4294901760
    %v981 = vsub.f32 %v63, %v980
    %982 = vmatpush1.msra.mxu0 %v981
    %983 = vmatprep.subr.mxu0 0.0
    %v984 = vand.u32 %v64, 4294901760
    %v985 = vsub.f32 %v64, %v984
    %986 = vmatpush1.msra.mxu0 %v985
    %987 = vmatprep.subr.mxu0 0.0
    %v988 = vand.u32 %v65, 4294901760
    %v989 = vsub.f32 %v65, %v988
    %990 = vmatpush1.msra.mxu0 %v989
    %991 = vmatprep.subr.mxu0 0.0
    %v992 = vand.u32 %v66, 4294901760
    %v993 = vsub.f32 %v66, %v992
    %994 = vmatpush1.msra.mxu0 %v993
    %995 = vmatprep.subr.mxu0 0.0
    %v996 = vand.u32 %v67, 4294901760
    %v997 = vsub.f32 %v67, %v996
    %998 = vmatpush1.msra.mxu0 %v997
    %999 = vmatprep.subr.mxu0 0.0
    %v1000 = vand.u32 %v68, 4294901760
    %v1001 = vsub.f32 %v68, %v1000
    %1002 = vmatpush1.msra.mxu0 %v1001
    %1003 = vmatprep.subr.mxu0 0.0
    %v1004 = vand.u32 %v69, 4294901760
    %v1005 = vsub.f32 %v69, %v1004
    %1006 = vmatpush1.msra.mxu0 %v1005
    %1007 = vmatprep.subr.mxu0 0.0
    %v1008 = vand.u32 %v70, 4294901760
    %v1009 = vsub.f32 %v70, %v1008
    %1010 = vmatpush1.msra.mxu0 %v1009
    %1011 = vmatprep.subr.mxu0 0.0
    %v1012 = vand.u32 %v71, 4294901760
    %v1013 = vsub.f32 %v71, %v1012
    %1014 = vmatpush1.msra.mxu0 %v1013
    %1015 = vmatprep.subr.mxu0 0.0
    %v1016 = vand.u32 %v72, 4294901760
    %v1017 = vsub.f32 %v72, %v1016
    %1018 = vmatpush1.msra.mxu0 %v1017
    %1019 = vmatprep.subr.mxu0 0.0
    %v1020 = vand.u32 %v73, 4294901760
    %v1021 = vsub.f32 %v73, %v1020
    %1022 = vmatpush1.msra.mxu0 %v1021
    %1023 = vmatprep.subr.mxu0 0.0
    %1024 = vmatpush1.msra.mxu0 0.0
    %1025 = vmatprep.subr.mxu0 0.0
    %1026 = vmatpush1.msra.mxu0 0.0
    %1027 = vmatprep.subr.mxu0 0.0
    %1028 = vmatpush1.msra.mxu0 0.0
    %1029 = vmatprep.subr.mxu0 0.0
    %1030 = vmatpush1.msra.mxu0 0.0
    %1031 = vmatprep.subr.mxu0 0.0
    %1032 = vmatpush1.msra.mxu0 0.0
    %1033 = vmatprep.subr.mxu0 0.0
    %1034 = vmatpush1.msra.mxu0 0.0
    %1035 = vmatprep.subr.mxu0 0.0
    %1036 = vmatpush1.msra.mxu0 0.0
    %1037 = vmatprep.subr.mxu0 0.0
    %1038 = vmatpush1.msra.mxu0 0.0
    %1039 = vmatprep.subr.mxu0 0.0
    %1040 = vmatpush1.msra.mxu0 0.0
    %1041 = vmatprep.subr.mxu0 0.0
    %1042 = vmatpush1.msra.mxu0 0.0
    %1043 = vmatprep.subr.mxu0 0.0
    %1044 = vmatpush1.msra.mxu0 0.0
    %1045 = vmatprep.subr.mxu0 0.0
    %1046 = vmatpush1.msra.mxu0 0.0
    %1047 = vmatprep.subr.mxu0 0.0
    %1048 = vmatpush1.msra.mxu0 0.0
    %1049 = vmatprep.subr.mxu0 0.0
    %1050 = vmatpush1.msra.mxu0 0.0
    %1051 = vmatprep.subr.mxu0 0.0
    %1052 = vmatpush1.msra.mxu0 0.0
    %1053 = vmatprep.subr.mxu0 0.0
    %1054 = vmatpush1.msra.mxu0 0.0
    %1055 = vmatprep.mubr.f32.mxu0 0.0
    %v1056 = vand.u32 %v715, 4294901760
    %v1057 = vsub.f32 %v715, %v1056
    %1058 = vmatmul.mubr.f32.gmra.mrb[0].mxu0 %v1057
    %v1059 = vpop.f32.mrb[0].mxu0
    %v1060 = vadd.f32 %v956, %v1059
    %v1061 = vpop.f32.mrb[0].mxu0
    %1062 = vdwg.mxu0
    %1063 = vmatprep.subr.mxu0 0.0
    %v1064 = vand.u32 %v58, 4294901760
    %1065 = vmatpush1.msra.mxu0 %v1064
    %1066 = vmatprep.subr.mxu0 0.0
    %v1067 = vand.u32 %v59, 4294901760
    %1068 = vmatpush1.msra.mxu0 %v1067
    %1069 = vmatprep.subr.mxu0 0.0
    %v1070 = vand.u32 %v60, 4294901760
    %1071 = vmatpush1.msra.mxu0 %v1070
    %1072 = vmatprep.subr.mxu0 0.0
    %v1073 = vand.u32 %v61, 4294901760
    %1074 = vmatpush1.msra.mxu0 %v1073
    %1075 = vmatprep.subr.mxu0 0.0
    %v1076 = vand.u32 %v62, 4294901760
    %1077 = vmatpush1.msra.mxu0 %v1076
    %1078 = vmatprep.subr.mxu0 0.0
    %v1079 = vand.u32 %v63, 4294901760
    %1080 = vmatpush1.msra.mxu0 %v1079
    %1081 = vmatprep.subr.mxu0 0.0
    %v1082 = vand.u32 %v64, 4294901760
    %1083 = vmatpush1.msra.mxu0 %v1082
    %1084 = vmatprep.subr.mxu0 0.0
    %v1085 = vand.u32 %v65, 4294901760
    %1086 = vmatpush1.msra.mxu0 %v1085
    %1087 = vmatprep.subr.mxu0 0.0
    %v1088 = vand.u32 %v66, 4294901760
    %1089 = vmatpush1.msra.mxu0 %v1088
    %1090 = vmatprep.subr.mxu0 0.0
    %v1091 = vand.u32 %v67, 4294901760
    %1092 = vmatpush1.msra.mxu0 %v1091
    %1093 = vmatprep.subr.mxu0 0.0
    %v1094 = vand.u32 %v68, 4294901760
    %1095 = vmatpush1.msra.mxu0 %v1094
    %1096 = vmatprep.subr.mxu0 0.0
    %v1097 = vand.u32 %v69, 4294901760
    %1098 = vmatpush1.msra.mxu0 %v1097
    %1099 = vmatprep.subr.mxu0 0.0
    %v1100 = vand.u32 %v70, 4294901760
    %1101 = vmatpush1.msra.mxu0 %v1100
    %1102 = vmatprep.subr.mxu0 0.0
    %v1103 = vand.u32 %v71, 4294901760
    %1104 = vmatpush1.msra.mxu0 %v1103
    %1105 = vmatprep.subr.mxu0 0.0
    %v1106 = vand.u32 %v72, 4294901760
    %1107 = vmatpush1.msra.mxu0 %v1106
    %1108 = vmatprep.subr.mxu0 0.0
    %v1109 = vand.u32 %v73, 4294901760
    %1110 = vmatpush1.msra.mxu0 %v1109
    %1111 = vmatprep.subr.mxu0 0.0
    %1112 = vmatpush1.msra.mxu0 0.0
    %1113 = vmatprep.subr.mxu0 0.0
    %1114 = vmatpush1.msra.mxu0 0.0
    %1115 = vmatprep.subr.mxu0 0.0
    %1116 = vmatpush1.msra.mxu0 0.0
    %1117 = vmatprep.subr.mxu0 0.0
    %1118 = vmatpush1.msra.mxu0 0.0
    %1119 = vmatprep.subr.mxu0 0.0
    %1120 = vmatpush1.msra.mxu0 0.0
    %1121 = vmatprep.subr.mxu0 0.0
    %1122 = vmatpush1.msra.mxu0 0.0
    %1123 = vmatprep.subr.mxu0 0.0
    %1124 = vmatpush1.msra.mxu0 0.0
    %1125 = vmatprep.subr.mxu0 0.0
    %1126 = vmatpush1.msra.mxu0 0.0
    %1127 = vmatprep.subr.mxu0 0.0
    %1128 = vmatpush1.msra.mxu0 0.0
    %1129 = vmatprep.subr.mxu0 0.0
    %1130 = vmatpush1.msra.mxu0 0.0
    %1131 = vmatprep.subr.mxu0 0.0
    %1132 = vmatpush1.msra.mxu0 0.0
    %1133 = vmatprep.subr.mxu0 0.0
    %1134 = vmatpush1.msra.mxu0 0.0
    %1135 = vmatprep.subr.mxu0 0.0
    %1136 = vmatpush1.msra.mxu0 0.0
    %1137 = vmatprep.subr.mxu0 0.0
    %1138 = vmatpush1.msra.mxu0 0.0
    %1139 = vmatprep.subr.mxu0 0.0
    %1140 = vmatpush1.msra.mxu0 0.0
    %1141 = vmatprep.subr.mxu0 0.0
    %1142 = vmatpush1.msra.mxu0 0.0
    %1143 = vmatprep.mubr.f32.mxu0 0.0
    %v1144 = vand.u32 %v715, 4294901760
    %v1145 = vsub.f32 %v715, %v1144
    %v1146 = vand.u32 %v1145, 4294901760
    %1147 = vmatmul.mubr.f32.gmra.mrb[0].mxu0 %v1146
    %v1148 = vpop.f32.mrb[0].mxu0
    %v1149 = vadd.f32 %v1060, %v1148
    %v1150 = vpop.f32.mrb[0].mxu0
    %1151 = vdwg.mxu0
    %1152 = vmatprep.subr.mxu0 0.0
    %v1153 = vand.u32 %v58, 4294901760
    %v1154 = vsub.f32 %v58, %v1153
    %v1155 = vand.u32 %v1154, 4294901760
    %1156 = vmatpush1.msra.mxu0 %v1155
    %1157 = vmatprep.subr.mxu0 0.0
    %v1158 = vand.u32 %v59, 4294901760
    %v1159 = vsub.f32 %v59, %v1158
    %v1160 = vand.u32 %v1159, 4294901760
    %1161 = vmatpush1.msra.mxu0 %v1160
    %1162 = vmatprep.subr.mxu0 0.0
    %v1163 = vand.u32 %v60, 4294901760
    %v1164 = vsub.f32 %v60, %v1163
    %v1165 = vand.u32 %v1164, 4294901760
    %1166 = vmatpush1.msra.mxu0 %v1165
    %1167 = vmatprep.subr.mxu0 0.0
    %v1168 = vand.u32 %v61, 4294901760
    %v1169 = vsub.f32 %v61, %v1168
    %v1170 = vand.u32 %v1169, 4294901760
    %1171 = vmatpush1.msra.mxu0 %v1170
    %1172 = vmatprep.subr.mxu0 0.0
    %v1173 = vand.u32 %v62, 4294901760
    %v1174 = vsub.f32 %v62, %v1173
    %v1175 = vand.u32 %v1174, 4294901760
    %1176 = vmatpush1.msra.mxu0 %v1175
    %1177 = vmatprep.subr.mxu0 0.0
    %v1178 = vand.u32 %v63, 4294901760
    %v1179 = vsub.f32 %v63, %v1178
    %v1180 = vand.u32 %v1179, 4294901760
    %1181 = vmatpush1.msra.mxu0 %v1180
    %1182 = vmatprep.subr.mxu0 0.0
    %v1183 = vand.u32 %v64, 4294901760
    %v1184 = vsub.f32 %v64, %v1183
    %v1185 = vand.u32 %v1184, 4294901760
    %1186 = vmatpush1.msra.mxu0 %v1185
    %1187 = vmatprep.subr.mxu0 0.0
    %v1188 = vand.u32 %v65, 4294901760
    %v1189 = vsub.f32 %v65, %v1188
    %v1190 = vand.u32 %v1189, 4294901760
    %1191 = vmatpush1.msra.mxu0 %v1190
    %1192 = vmatprep.subr.mxu0 0.0
    %v1193 = vand.u32 %v66, 4294901760
    %v1194 = vsub.f32 %v66, %v1193
    %v1195 = vand.u32 %v1194, 4294901760
    %1196 = vmatpush1.msra.mxu0 %v1195
    %1197 = vmatprep.subr.mxu0 0.0
    %v1198 = vand.u32 %v67, 4294901760
    %v1199 = vsub.f32 %v67, %v1198
    %v1200 = vand.u32 %v1199, 4294901760
    %1201 = vmatpush1.msra.mxu0 %v1200
    %1202 = vmatprep.subr.mxu0 0.0
    %v1203 = vand.u32 %v68, 4294901760
    %v1204 = vsub.f32 %v68, %v1203
    %v1205 = vand.u32 %v1204, 4294901760
    %1206 = vmatpush1.msra.mxu0 %v1205
    %1207 = vmatprep.subr.mxu0 0.0
    %v1208 = vand.u32 %v69, 4294901760
    %v1209 = vsub.f32 %v69, %v1208
    %v1210 = vand.u32 %v1209, 4294901760
    %1211 = vmatpush1.msra.mxu0 %v1210
    %1212 = vmatprep.subr.mxu0 0.0
    %v1213 = vand.u32 %v70, 4294901760
    %v1214 = vsub.f32 %v70, %v1213
    %v1215 = vand.u32 %v1214, 4294901760
    %1216 = vmatpush1.msra.mxu0 %v1215
    %1217 = vmatprep.subr.mxu0 0.0
    %v1218 = vand.u32 %v71, 4294901760
    %v1219 = vsub.f32 %v71, %v1218
    %v1220 = vand.u32 %v1219, 4294901760
    %1221 = vmatpush1.msra.mxu0 %v1220
    %1222 = vmatprep.subr.mxu0 0.0
    %v1223 = vand.u32 %v72, 4294901760
    %v1224 = vsub.f32 %v72, %v1223
    %v1225 = vand.u32 %v1224, 4294901760
    %1226 = vmatpush1.msra.mxu0 %v1225
    %1227 = vmatprep.subr.mxu0 0.0
    %v1228 = vand.u32 %v73, 4294901760
    %v1229 = vsub.f32 %v73, %v1228
    %v1230 = vand.u32 %v1229, 4294901760
    %1231 = vmatpush1.msra.mxu0 %v1230
    %1232 = vmatprep.subr.mxu0 0.0
    %1233 = vmatpush1.msra.mxu0 0.0
    %1234 = vmatprep.subr.mxu0 0.0
    %1235 = vmatpush1.msra.mxu0 0.0
    %1236 = vmatprep.subr.mxu0 0.0
    %1237 = vmatpush1.msra.mxu0 0.0
    %1238 = vmatprep.subr.mxu0 0.0
    %1239 = vmatpush1.msra.mxu0 0.0
    %1240 = vmatprep.subr.mxu0 0.0
    %1241 = vmatpush1.msra.mxu0 0.0
    %1242 = vmatprep.subr.mxu0 0.0
    %1243 = vmatpush1.msra.mxu0 0.0
    %1244 = vmatprep.subr.mxu0 0.0
    %1245 = vmatpush1.msra.mxu0 0.0
    %1246 = vmatprep.subr.mxu0 0.0
    %1247 = vmatpush1.msra.mxu0 0.0
    %1248 = vmatprep.subr.mxu0 0.0
    %1249 = vmatpush1.msra.mxu0 0.0
    %1250 = vmatprep.subr.mxu0 0.0
    %1251 = vmatpush1.msra.mxu0 0.0
    %1252 = vmatprep.subr.mxu0 0.0
    %1253 = vmatpush1.msra.mxu0 0.0
    %1254 = vmatprep.subr.mxu0 0.0
    %1255 = vmatpush1.msra.mxu0 0.0
    %1256 = vmatprep.subr.mxu0 0.0
    %1257 = vmatpush1.msra.mxu0 0.0
    %1258 = vmatprep.subr.mxu0 0.0
    %1259 = vmatpush1.msra.mxu0 0.0
    %1260 = vmatprep.subr.mxu0 0.0
    %1261 = vmatpush1.msra.mxu0 0.0
    %1262 = vmatprep.subr.mxu0 0.0
    %1263 = vmatpush1.msra.mxu0 0.0
    %1264 = vmatprep.mubr.f32.mxu0 0.0
    %v1265 = vand.u32 %v715, 4294901760
    %1266 = vmatmul.mubr.f32.gmra.mrb[0].mxu0 %v1265
    %v1267 = vpop.f32.mrb[0].mxu0
    %v1268 = vadd.f32 %v1149, %v1267
    %v1269 = vpop.f32.mrb[0].mxu0
    %1270 = vdwg.mxu0
    %1271 = vmatprep.subr.mxu0 0.0
    %v1272 = vand.u32 %v58, 4294901760
    %1273 = vmatpush1.msra.mxu0 %v1272
    %1274 = vmatprep.subr.mxu0 0.0
    %v1275 = vand.u32 %v59, 4294901760
    %1276 = vmatpush1.msra.mxu0 %v1275
    %1277 = vmatprep.subr.mxu0 0.0
    %v1278 = vand.u32 %v60, 4294901760
    %1279 = vmatpush1.msra.mxu0 %v1278
    %1280 = vmatprep.subr.mxu0 0.0
    %v1281 = vand.u32 %v61, 4294901760
    %1282 = vmatpush1.msra.mxu0 %v1281
    %1283 = vmatprep.subr.mxu0 0.0
    %v1284 = vand.u32 %v62, 4294901760
    %1285 = vmatpush1.msra.mxu0 %v1284
    %1286 = vmatprep.subr.mxu0 0.0
    %v1287 = vand.u32 %v63, 4294901760
    %1288 = vmatpush1.msra.mxu0 %v1287
    %1289 = vmatprep.subr.mxu0 0.0
    %v1290 = vand.u32 %v64, 4294901760
    %1291 = vmatpush1.msra.mxu0 %v1290
    %1292 = vmatprep.subr.mxu0 0.0
    %v1293 = vand.u32 %v65, 4294901760
    %1294 = vmatpush1.msra.mxu0 %v1293
    %1295 = vmatprep.subr.mxu0 0.0
    %v1296 = vand.u32 %v66, 4294901760
    %1297 = vmatpush1.msra.mxu0 %v1296
    %1298 = vmatprep.subr.mxu0 0.0
    %v1299 = vand.u32 %v67, 4294901760
    %1300 = vmatpush1.msra.mxu0 %v1299
    %1301 = vmatprep.subr.mxu0 0.0
    %v1302 = vand.u32 %v68, 4294901760
    %1303 = vmatpush1.msra.mxu0 %v1302
    %1304 = vmatprep.subr.mxu0 0.0
    %v1305 = vand.u32 %v69, 4294901760
    %1306 = vmatpush1.msra.mxu0 %v1305
    %1307 = vmatprep.subr.mxu0 0.0
    %v1308 = vand.u32 %v70, 4294901760
    %1309 = vmatpush1.msra.mxu0 %v1308
    %1310 = vmatprep.subr.mxu0 0.0
    %v1311 = vand.u32 %v71, 4294901760
    %1312 = vmatpush1.msra.mxu0 %v1311
    %1313 = vmatprep.subr.mxu0 0.0
    %v1314 = vand.u32 %v72, 4294901760
    %1315 = vmatpush1.msra.mxu0 %v1314
    %1316 = vmatprep.subr.mxu0 0.0
    %v1317 = vand.u32 %v73, 4294901760
    %1318 = vmatpush1.msra.mxu0 %v1317
    %1319 = vmatprep.subr.mxu0 0.0
    %1320 = vmatpush1.msra.mxu0 0.0
    %1321 = vmatprep.subr.mxu0 0.0
    %1322 = vmatpush1.msra.mxu0 0.0
    %1323 = vmatprep.subr.mxu0 0.0
    %1324 = vmatpush1.msra.mxu0 0.0
    %1325 = vmatprep.subr.mxu0 0.0
    %1326 = vmatpush1.msra.mxu0 0.0
    %1327 = vmatprep.subr.mxu0 0.0
    %1328 = vmatpush1.msra.mxu0 0.0
    %1329 = vmatprep.subr.mxu0 0.0
    %1330 = vmatpush1.msra.mxu0 0.0
    %1331 = vmatprep.subr.mxu0 0.0
    %1332 = vmatpush1.msra.mxu0 0.0
    %1333 = vmatprep.subr.mxu0 0.0
    %1334 = vmatpush1.msra.mxu0 0.0
    %1335 = vmatprep.subr.mxu0 0.0
    %1336 = vmatpush1.msra.mxu0 0.0
    %1337 = vmatprep.subr.mxu0 0.0
    %1338 = vmatpush1.msra.mxu0 0.0
    %1339 = vmatprep.subr.mxu0 0.0
    %1340 = vmatpush1.msra.mxu0 0.0
    %1341 = vmatprep.subr.mxu0 0.0
    %1342 = vmatpush1.msra.mxu0 0.0
    %1343 = vmatprep.subr.mxu0 0.0
    %1344 = vmatpush1.msra.mxu0 0.0
    %1345 = vmatprep.subr.mxu0 0.0
    %1346 = vmatpush1.msra.mxu0 0.0
    %1347 = vmatprep.subr.mxu0 0.0
    %1348 = vmatpush1.msra.mxu0 0.0
    %1349 = vmatprep.subr.mxu0 0.0
    %1350 = vmatpush1.msra.mxu0 0.0
    %1351 = vmatprep.mubr.f32.mxu0 0.0
    %v1352 = vand.u32 %v715, 4294901760
    %1353 = vmatmul.mubr.f32.gmra.mrb[0].mxu0 %v1352
    %v1354 = vpop.f32.mrb[0].mxu0
    %v1355 = vadd.f32 %v1268, %v1354
    %v1356 = vpop.f32.mrb[0].mxu0
    %1357 = vdwg.mxu0
    %v1358 = vmul.f32 %v1355, 0.030303031
    %v1359 = vadd.f32 %v1358, 1e-08
    %v1360 = vrsqrt.pop %v1359
    %v1361 = vld [vmem:[#allocation7] sm:$0xff]
    %v1362 = vld [vmem:[#allocation7 + $0x8] sm:$0xff]
    %v1363 = vld [vmem:[#allocation7 + $0x10] sm:$0xff]
    %v1364 = vld [vmem:[#allocation7 + $0x18] sm:$0xff]
    %v1365 = vld [vmem:[#allocation7 + $0x20] sm:$0xff]
    %v1366 = vld [vmem:[#allocation7 + $0x28] sm:$0xff]
    %v1367 = vld [vmem:[#allocation7 + $0x30] sm:$0xff]
    %v1368 = vld [vmem:[#allocation7 + $0x38] sm:$0xff]
    %v1369 = vld [vmem:[#allocation7 + $0x40] sm:$0xff]
    %v1370 = vld [vmem:[#allocation7 + $0x48] sm:$0xff]
    %v1371 = vld [vmem:[#allocation7 + $0x50] sm:$0xff]
    %v1372 = vld [vmem:[#allocation7 + $0x58] sm:$0xff]
    %v1373 = vld [vmem:[#allocation7 + $0x60] sm:$0xff]
    %v1374 = vld [vmem:[#allocation7 + $0x68] sm:$0xff]
    %v1375 = vld [vmem:[#allocation7 + $0x70] sm:$0xff]
    %v1376 = vld [vmem:[#allocation7 + $0x78] sm:$0xff]
    %1377 = vmatprep.subr.mxu0 0.0
    %v1378 = vand.u32 %v1361, 4294901760
    %1379 = vmatpush1.msra.mxu0 %v1378
    %1380 = vmatprep.subr.mxu0 0.0
    %v1381 = vand.u32 %v1362, 4294901760
    %1382 = vmatpush1.msra.mxu0 %v1381
    %1383 = vmatprep.subr.mxu0 0.0
    %v1384 = vand.u32 %v1363, 4294901760
    %1385 = vmatpush1.msra.mxu0 %v1384
    %1386 = vmatprep.subr.mxu0 0.0
    %v1387 = vand.u32 %v1364, 4294901760
    %1388 = vmatpush1.msra.mxu0 %v1387
    %1389 = vmatprep.subr.mxu0 0.0
    %v1390 = vand.u32 %v1365, 4294901760
    %1391 = vmatpush1.msra.mxu0 %v1390
    %1392 = vmatprep.subr.mxu0 0.0
    %v1393 = vand.u32 %v1366, 4294901760
    %1394 = vmatpush1.msra.mxu0 %v1393
    %1395 = vmatprep.subr.mxu0 0.0
    %v1396 = vand.u32 %v1367, 4294901760
    %1397 = vmatpush1.msra.mxu0 %v1396
    %1398 = vmatprep.subr.mxu0 0.0
    %v1399 = vand.u32 %v1368, 4294901760
    %1400 = vmatpush1.msra.mxu0 %v1399
    %1401 = vmatprep.subr.mxu0 0.0
    %v1402 = vand.u32 %v1369, 4294901760
    %1403 = vmatpush1.msra.mxu0 %v1402
    %1404 = vmatprep.subr.mxu0 0.0
    %v1405 = vand.u32 %v1370, 4294901760
    %1406 = vmatpush1.msra.mxu0 %v1405
    %1407 = vmatprep.subr.mxu0 0.0
    %v1408 = vand.u32 %v1371, 4294901760
    %1409 = vmatpush1.msra.mxu0 %v1408
    %1410 = vmatprep.subr.mxu0 0.0
    %v1411 = vand.u32 %v1372, 4294901760
    %1412 = vmatpush1.msra.mxu0 %v1411
    %1413 = vmatprep.subr.mxu0 0.0
    %v1414 = vand.u32 %v1373, 4294901760
    %1415 = vmatpush1.msra.mxu0 %v1414
    %1416 = vmatprep.subr.mxu0 0.0
    %v1417 = vand.u32 %v1374, 4294901760
    %1418 = vmatpush1.msra.mxu0 %v1417
    %1419 = vmatprep.subr.mxu0 0.0
    %v1420 = vand.u32 %v1375, 4294901760
    %1421 = vmatpush1.msra.mxu0 %v1420
    %1422 = vmatprep.subr.mxu0 0.0
    %v1423 = vand.u32 %v1376, 4294901760
    %1424 = vmatpush1.msra.mxu0 %v1423
    %1425 = vmatprep.subr.mxu0 0.0
    %1426 = vmatpush1.msra.mxu0 0.0
    %1427 = vmatprep.subr.mxu0 0.0
    %1428 = vmatpush1.msra.mxu0 0.0
    %1429 = vmatprep.subr.mxu0 0.0
    %1430 = vmatpush1.msra.mxu0 0.0
    %1431 = vmatprep.subr.mxu0 0.0
    %1432 = vmatpush1.msra.mxu0 0.0
    %1433 = vmatprep.subr.mxu0 0.0
    %1434 = vmatpush1.msra.mxu0 0.0
    %1435 = vmatprep.subr.mxu0 0.0
    %1436 = vmatpush1.msra.mxu0 0.0
    %1437 = vmatprep.subr.mxu0 0.0
    %1438 = vmatpush1.msra.mxu0 0.0
    %1439 = vmatprep.subr.mxu0 0.0
    %1440 = vmatpush1.msra.mxu0 0.0
    %1441 = vmatprep.subr.mxu0 0.0
    %1442 = vmatpush1.msra.mxu0 0.0
    %1443 = vmatprep.subr.mxu0 0.0
    %1444 = vmatpush1.msra.mxu0 0.0
    %1445 = vmatprep.subr.mxu0 0.0
    %1446 = vmatpush1.msra.mxu0 0.0
    %1447 = vmatprep.subr.mxu0 0.0
    %1448 = vmatpush1.msra.mxu0 0.0
    %1449 = vmatprep.subr.mxu0 0.0
    %1450 = vmatpush1.msra.mxu0 0.0
    %1451 = vmatprep.subr.mxu0 0.0
    %1452 = vmatpush1.msra.mxu0 0.0
    %1453 = vmatprep.subr.mxu0 0.0
    %1454 = vmatpush1.msra.mxu0 0.0
    %1455 = vmatprep.subr.mxu0 0.0
    %1456 = vmatpush1.msra.mxu0 0.0
    %1457 = vmatprep.mubr.f32.mxu0 0.0
    %v1458 = vand.u32 %v1360, 4294901760
    %v1459 = vsub.f32 %v1360, %v1458
    %v1460 = vand.u32 %v1459, 4294901760
    %v1461 = vsub.f32 %v1459, %v1460
    %v1462 = vand.u32 %v1461, 4294901760
    %1463 = vmatmul.mubr.f32.gmra.mrb[0].mxu0 %v1462
    %v1464 = vpop.f32.mrb[0].mxu0
    %v1465 = vadd.f32 0.0, %v1464
    %v1466 = vpop.f32.mrb[0].mxu0
    %1467 = vdwg.mxu0
    %1468 = vmatprep.subr.mxu0 0.0
    %v1469 = vand.u32 %v1361, 4294901760
    %v1470 = vsub.f32 %v1361, %v1469
    %v1471 = vand.u32 %v1470, 4294901760
    %v1472 = vsub.f32 %v1470, %v1471
    %v1473 = vand.u32 %v1472, 4294901760
    %1474 = vmatpush1.msra.mxu0 %v1473
    %1475 = vmatprep.subr.mxu0 0.0
    %v1476 = vand.u32 %v1362, 4294901760
    %v1477 = vsub.f32 %v1362, %v1476
    %v1478 = vand.u32 %v1477, 4294901760
    %v1479 = vsub.f32 %v1477, %v1478
    %v1480 = vand.u32 %v1479, 4294901760
    %1481 = vmatpush1.msra.mxu0 %v1480
    %1482 = vmatprep.subr.mxu0 0.0
    %v1483 = vand.u32 %v1363, 4294901760
    %v1484 = vsub.f32 %v1363, %v1483
    %v1485 = vand.u32 %v1484, 4294901760
    %v1486 = vsub.f32 %v1484, %v1485
    %v1487 = vand.u32 %v1486, 4294901760
    %1488 = vmatpush1.msra.mxu0 %v1487
    %1489 = vmatprep.subr.mxu0 0.0
    %v1490 = vand.u32 %v1364, 4294901760
    %v1491 = vsub.f32 %v1364, %v1490
    %v1492 = vand.u32 %v1491, 4294901760
    %v1493 = vsub.f32 %v1491, %v1492
    %v1494 = vand.u32 %v1493, 4294901760
    %1495 = vmatpush1.msra.mxu0 %v1494
    %1496 = vmatprep.subr.mxu0 0.0
    %v1497 = vand.u32 %v1365, 4294901760
    %v1498 = vsub.f32 %v1365, %v1497
    %v1499 = vand.u32 %v1498, 4294901760
    %v1500 = vsub.f32 %v1498, %v1499
    %v1501 = vand.u32 %v1500, 4294901760
    %1502 = vmatpush1.msra.mxu0 %v1501
    %1503 = vmatprep.subr.mxu0 0.0
    %v1504 = vand.u32 %v1366, 4294901760
    %v1505 = vsub.f32 %v1366, %v1504
    %v1506 = vand.u32 %v1505, 4294901760
    %v1507 = vsub.f32 %v1505, %v1506
    %v1508 = vand.u32 %v1507, 4294901760
    %1509 = vmatpush1.msra.mxu0 %v1508
    %1510 = vmatprep.subr.mxu0 0.0
    %v1511 = vand.u32 %v1367, 4294901760
    %v1512 = vsub.f32 %v1367, %v1511
    %v1513 = vand.u32 %v1512, 4294901760
    %v1514 = vsub.f32 %v1512, %v1513
    %v1515 = vand.u32 %v1514, 4294901760
    %1516 = vmatpush1.msra.mxu0 %v1515
    %1517 = vmatprep.subr.mxu0 0.0
    %v1518 = vand.u32 %v1368, 4294901760
    %v1519 = vsub.f32 %v1368, %v1518
    %v1520 = vand.u32 %v1519, 4294901760
    %v1521 = vsub.f32 %v1519, %v1520
    %v1522 = vand.u32 %v1521, 4294901760
    %1523 = vmatpush1.msra.mxu0 %v1522
    %1524 = vmatprep.subr.mxu0 0.0
    %v1525 = vand.u32 %v1369, 4294901760
    %v1526 = vsub.f32 %v1369, %v1525
    %v1527 = vand.u32 %v1526, 4294901760
    %v1528 = vsub.f32 %v1526, %v1527
    %v1529 = vand.u32 %v1528, 4294901760
    %1530 = vmatpush1.msra.mxu0 %v1529
    %1531 = vmatprep.subr.mxu0 0.0
    %v1532 = vand.u32 %v1370, 4294901760
    %v1533 = vsub.f32 %v1370, %v1532
    %v1534 = vand.u32 %v1533, 4294901760
    %v1535 = vsub.f32 %v1533, %v1534
    %v1536 = vand.u32 %v1535, 4294901760
    %1537 = vmatpush1.msra.mxu0 %v1536
    %1538 = vmatprep.subr.mxu0 0.0
    %v1539 = vand.u32 %v1371, 4294901760
    %v1540 = vsub.f32 %v1371, %v1539
    %v1541 = vand.u32 %v1540, 4294901760
    %v1542 = vsub.f32 %v1540, %v1541
    %v1543 = vand.u32 %v1542, 4294901760
    %1544 = vmatpush1.msra.mxu0 %v1543
    %1545 = vmatprep.subr.mxu0 0.0
    %v1546 = vand.u32 %v1372, 4294901760
    %v1547 = vsub.f32 %v1372, %v1546
    %v1548 = vand.u32 %v1547, 4294901760
    %v1549 = vsub.f32 %v1547, %v1548
    %v1550 = vand.u32 %v1549, 4294901760
    %1551 = vmatpush1.msra.mxu0 %v1550
    %1552 = vmatprep.subr.mxu0 0.0
    %v1553 = vand.u32 %v1373, 4294901760
    %v1554 = vsub.f32 %v1373, %v1553
    %v1555 = vand.u32 %v1554, 4294901760
    %v1556 = vsub.f32 %v1554, %v1555
    %v1557 = vand.u32 %v1556, 4294901760
    %1558 = vmatpush1.msra.mxu0 %v1557
    %1559 = vmatprep.subr.mxu0 0.0
    %v1560 = vand.u32 %v1374, 4294901760
    %v1561 = vsub.f32 %v1374, %v1560
    %v1562 = vand.u32 %v1561, 4294901760
    %v1563 = vsub.f32 %v1561, %v1562
    %v1564 = vand.u32 %v1563, 4294901760
    %1565 = vmatpush1.msra.mxu0 %v1564
    %1566 = vmatprep.subr.mxu0 0.0
    %v1567 = vand.u32 %v1375, 4294901760
    %v1568 = vsub.f32 %v1375, %v1567
    %v1569 = vand.u32 %v1568, 4294901760
    %v1570 = vsub.f32 %v1568, %v1569
    %v1571 = vand.u32 %v1570, 4294901760
    %1572 = vmatpush1.msra.mxu0 %v1571
    %1573 = vmatprep.subr.mxu0 0.0
    %v1574 = vand.u32 %v1376, 4294901760
    %v1575 = vsub.f32 %v1376, %v1574
    %v1576 = vand.u32 %v1575, 4294901760
    %v1577 = vsub.f32 %v1575, %v1576
    %v1578 = vand.u32 %v1577, 4294901760
    %1579 = vmatpush1.msra.mxu0 %v1578
    %1580 = vmatprep.subr.mxu0 0.0
    %1581 = vmatpush1.msra.mxu0 0.0
    %1582 = vmatprep.subr.mxu0 0.0
    %1583 = vmatpush1.msra.mxu0 0.0
    %1584 = vmatprep.subr.mxu0 0.0
    %1585 = vmatpush1.msra.mxu0 0.0
    %1586 = vmatprep.subr.mxu0 0.0
    %1587 = vmatpush1.msra.mxu0 0.0
    %1588 = vmatprep.subr.mxu0 0.0
    %1589 = vmatpush1.msra.mxu0 0.0
    %1590 = vmatprep.subr.mxu0 0.0
    %1591 = vmatpush1.msra.mxu0 0.0
    %1592 = vmatprep.subr.mxu0 0.0
    %1593 = vmatpush1.msra.mxu0 0.0
    %1594 = vmatprep.subr.mxu0 0.0
    %1595 = vmatpush1.msra.mxu0 0.0
    %1596 = vmatprep.subr.mxu0 0.0
    %1597 = vmatpush1.msra.mxu0 0.0
    %1598 = vmatprep.subr.mxu0 0.0
    %1599 = vmatpush1.msra.mxu0 0.0
    %1600 = vmatprep.subr.mxu0 0.0
    %1601 = vmatpush1.msra.mxu0 0.0
    %1602 = vmatprep.subr.mxu0 0.0
    %1603 = vmatpush1.msra.mxu0 0.0
    %1604 = vmatprep.subr.mxu0 0.0
    %1605 = vmatpush1.msra.mxu0 0.0
    %1606 = vmatprep.subr.mxu0 0.0
    %1607 = vmatpush1.msra.mxu0 0.0
    %1608 = vmatprep.subr.mxu0 0.0
    %1609 = vmatpush1.msra.mxu0 0.0
    %1610 = vmatprep.subr.mxu0 0.0
    %1611 = vmatpush1.msra.mxu0 0.0
    %1612 = vmatprep.mubr.f32.mxu0 0.0
    %v1613 = vand.u32 %v1360, 4294901760
    %1614 = vmatmul.mubr.f32.gmra.mrb[0].mxu0 %v1613
    %v1615 = vpop.f32.mrb[0].mxu0
    %v1616 = vadd.f32 %v1465, %v1615
    %v1617 = vpop.f32.mrb[0].mxu0
    %1618 = vdwg.mxu0
    %1619 = vmatprep.subr.mxu0 0.0
    %v1620 = vand.u32 %v1361, 4294901760
    %v1621 = vsub.f32 %v1361, %v1620
    %1622 = vmatpush1.msra.mxu0 %v1621
    %1623 = vmatprep.subr.mxu0 0.0
    %v1624 = vand.u32 %v1362, 4294901760
    %v1625 = vsub.f32 %v1362, %v1624
    %1626 = vmatpush1.msra.mxu0 %v1625
    %1627 = vmatprep.subr.mxu0 0.0
    %v1628 = vand.u32 %v1363, 4294901760
    %v1629 = vsub.f32 %v1363, %v1628
    %1630 = vmatpush1.msra.mxu0 %v1629
    %1631 = vmatprep.subr.mxu0 0.0
    %v1632 = vand.u32 %v1364, 4294901760
    %v1633 = vsub.f32 %v1364, %v1632
    %1634 = vmatpush1.msra.mxu0 %v1633
    %1635 = vmatprep.subr.mxu0 0.0
    %v1636 = vand.u32 %v1365, 4294901760
    %v1637 = vsub.f32 %v1365, %v1636
    %1638 = vmatpush1.msra.mxu0 %v1637
    %1639 = vmatprep.subr.mxu0 0.0
    %v1640 = vand.u32 %v1366, 4294901760
    %v1641 = vsub.f32 %v1366, %v1640
    %1642 = vmatpush1.msra.mxu0 %v1641
    %1643 = vmatprep.subr.mxu0 0.0
    %v1644 = vand.u32 %v1367, 4294901760
    %v1645 = vsub.f32 %v1367, %v1644
    %1646 = vmatpush1.msra.mxu0 %v1645
    %1647 = vmatprep.subr.mxu0 0.0
    %v1648 = vand.u32 %v1368, 4294901760
    %v1649 = vsub.f32 %v1368, %v1648
    %1650 = vmatpush1.msra.mxu0 %v1649
    %1651 = vmatprep.subr.mxu0 0.0
    %v1652 = vand.u32 %v1369, 4294901760
    %v1653 = vsub.f32 %v1369, %v1652
    %1654 = vmatpush1.msra.mxu0 %v1653
    %1655 = vmatprep.subr.mxu0 0.0
    %v1656 = vand.u32 %v1370, 4294901760
    %v1657 = vsub.f32 %v1370, %v1656
    %1658 = vmatpush1.msra.mxu0 %v1657
    %1659 = vmatprep.subr.mxu0 0.0
    %v1660 = vand.u32 %v1371, 4294901760
    %v1661 = vsub.f32 %v1371, %v1660
    %1662 = vmatpush1.msra.mxu0 %v1661
    %1663 = vmatprep.subr.mxu0 0.0
    %v1664 = vand.u32 %v1372, 4294901760
    %v1665 = vsub.f32 %v1372, %v1664
    %1666 = vmatpush1.msra.mxu0 %v1665
    %1667 = vmatprep.subr.mxu0 0.0
    %v1668 = vand.u32 %v1373, 4294901760
    %v1669 = vsub.f32 %v1373, %v1668
    %1670 = vmatpush1.msra.mxu0 %v1669
    %1671 = vmatprep.subr.mxu0 0.0
    %v1672 = vand.u32 %v1374, 4294901760
    %v1673 = vsub.f32 %v1374, %v1672
    %1674 = vmatpush1.msra.mxu0 %v1673
    %1675 = vmatprep.subr.mxu0 0.0
    %v1676 = vand.u32 %v1375, 4294901760
    %v1677 = vsub.f32 %v1375, %v1676
    %1678 = vmatpush1.msra.mxu0 %v1677
    %1679 = vmatprep.subr.mxu0 0.0
    %v1680 = vand.u32 %v1376, 4294901760
    %v1681 = vsub.f32 %v1376, %v1680
    %1682 = vmatpush1.msra.mxu0 %v1681
    %1683 = vmatprep.subr.mxu0 0.0
    %1684 = vmatpush1.msra.mxu0 0.0
    %1685 = vmatprep.subr.mxu0 0.0
    %1686 = vmatpush1.msra.mxu0 0.0
    %1687 = vmatprep.subr.mxu0 0.0
    %1688 = vmatpush1.msra.mxu0 0.0
    %1689 = vmatprep.subr.mxu0 0.0
    %1690 = vmatpush1.msra.mxu0 0.0
    %1691 = vmatprep.subr.mxu0 0.0
    %1692 = vmatpush1.msra.mxu0 0.0
    %1693 = vmatprep.subr.mxu0 0.0
    %1694 = vmatpush1.msra.mxu0 0.0
    %1695 = vmatprep.subr.mxu0 0.0
    %1696 = vmatpush1.msra.mxu0 0.0
    %1697 = vmatprep.subr.mxu0 0.0
    %1698 = vmatpush1.msra.mxu0 0.0
    %1699 = vmatprep.subr.mxu0 0.0
    %1700 = vmatpush1.msra.mxu0 0.0
    %1701 = vmatprep.subr.mxu0 0.0
    %1702 = vmatpush1.msra.mxu0 0.0
    %1703 = vmatprep.subr.mxu0 0.0
    %1704 = vmatpush1.msra.mxu0 0.0
    %1705 = vmatprep.subr.mxu0 0.0
    %1706 = vmatpush1.msra.mxu0 0.0
    %1707 = vmatprep.subr.mxu0 0.0
    %1708 = vmatpush1.msra.mxu0 0.0
    %1709 = vmatprep.subr.mxu0 0.0
    %1710 = vmatpush1.msra.mxu0 0.0
    %1711 = vmatprep.subr.mxu0 0.0
    %1712 = vmatpush1.msra.mxu0 0.0
    %1713 = vmatprep.subr.mxu0 0.0
    %1714 = vmatpush1.msra.mxu0 0.0
    %1715 = vmatprep.mubr.f32.mxu0 0.0
    %v1716 = vand.u32 %v1360, 4294901760
    %v1717 = vsub.f32 %v1360, %v1716
    %1718 = vmatmul.mubr.f32.gmra.mrb[0].mxu0 %v1717
    %v1719 = vpop.f32.mrb[0].mxu0
    %v1720 = vadd.f32 %v1616, %v1719
    %v1721 = vpop.f32.mrb[0].mxu0
    %1722 = vdwg.mxu0
    %1723 = vmatprep.subr.mxu0 0.0
    %v1724 = vand.u32 %v1361, 4294901760
    %1725 = vmatpush1.msra.mxu0 %v1724
    %1726 = vmatprep.subr.mxu0 0.0
    %v1727 = vand.u32 %v1362, 4294901760
    %1728 = vmatpush1.msra.mxu0 %v1727
    %1729 = vmatprep.subr.mxu0 0.0
    %v1730 = vand.u32 %v1363, 4294901760
    %1731 = vmatpush1.msra.mxu0 %v1730
    %1732 = vmatprep.subr.mxu0 0.0
    %v1733 = vand.u32 %v1364, 4294901760
    %1734 = vmatpush1.msra.mxu0 %v1733
    %1735 = vmatprep.subr.mxu0 0.0
    %v1736 = vand.u32 %v1365, 4294901760
    %1737 = vmatpush1.msra.mxu0 %v1736
    %1738 = vmatprep.subr.mxu0 0.0
    %v1739 = vand.u32 %v1366, 4294901760
    %1740 = vmatpush1.msra.mxu0 %v1739
    %1741 = vmatprep.subr.mxu0 0.0
    %v1742 = vand.u32 %v1367, 4294901760
    %1743 = vmatpush1.msra.mxu0 %v1742
    %1744 = vmatprep.subr.mxu0 0.0
    %v1745 = vand.u32 %v1368, 4294901760
    %1746 = vmatpush1.msra.mxu0 %v1745
    %1747 = vmatprep.subr.mxu0 0.0
    %v1748 = vand.u32 %v1369, 4294901760
    %1749 = vmatpush1.msra.mxu0 %v1748
    %1750 = vmatprep.subr.mxu0 0.0
    %v1751 = vand.u32 %v1370, 4294901760
    %1752 = vmatpush1.msra.mxu0 %v1751
    %1753 = vmatprep.subr.mxu0 0.0
    %v1754 = vand.u32 %v1371, 4294901760
    %1755 = vmatpush1.msra.mxu0 %v1754
    %1756 = vmatprep.subr.mxu0 0.0
    %v1757 = vand.u32 %v1372, 4294901760
    %1758 = vmatpush1.msra.mxu0 %v1757
    %1759 = vmatprep.subr.mxu0 0.0
    %v1760 = vand.u32 %v1373, 4294901760
    %1761 = vmatpush1.msra.mxu0 %v1760
    %1762 = vmatprep.subr.mxu0 0.0
    %v1763 = vand.u32 %v1374, 4294901760
    %1764 = vmatpush1.msra.mxu0 %v1763
    %1765 = vmatprep.subr.mxu0 0.0
    %v1766 = vand.u32 %v1375, 4294901760
    %1767 = vmatpush1.msra.mxu0 %v1766
    %1768 = vmatprep.subr.mxu0 0.0
    %v1769 = vand.u32 %v1376, 4294901760
    %1770 = vmatpush1.msra.mxu0 %v1769
    %1771 = vmatprep.subr.mxu0 0.0
    %1772 = vmatpush1.msra.mxu0 0.0
    %1773 = vmatprep.subr.mxu0 0.0
    %1774 = vmatpush1.msra.mxu0 0.0
    %1775 = vmatprep.subr.mxu0 0.0
    %1776 = vmatpush1.msra.mxu0 0.0
    %1777 = vmatprep.subr.mxu0 0.0
    %1778 = vmatpush1.msra.mxu0 0.0
    %1779 = vmatprep.subr.mxu0 0.0
    %1780 = vmatpush1.msra.mxu0 0.0
    %1781 = vmatprep.subr.mxu0 0.0
    %1782 = vmatpush1.msra.mxu0 0.0
    %1783 = vmatprep.subr.mxu0 0.0
    %1784 = vmatpush1.msra.mxu0 0.0
    %1785 = vmatprep.subr.mxu0 0.0
    %1786 = vmatpush1.msra.mxu0 0.0
    %1787 = vmatprep.subr.mxu0 0.0
    %1788 = vmatpush1.msra.mxu0 0.0
    %1789 = vmatprep.subr.mxu0 0.0
    %1790 = vmatpush1.msra.mxu0 0.0
    %1791 = vmatprep.subr.mxu0 0.0
    %1792 = vmatpush1.msra.mxu0 0.0
    %1793 = vmatprep.subr.mxu0 0.0
    %1794 = vmatpush1.msra.mxu0 0.0
    %1795 = vmatprep.subr.mxu0 0.0
    %1796 = vmatpush1.msra.mxu0 0.0
    %1797 = vmatprep.subr.mxu0 0.0
    %1798 = vmatpush1.msra.mxu0 0.0
    %1799 = vmatprep.subr.mxu0 0.0
    %1800 = vmatpush1.msra.mxu0 0.0
    %1801 = vmatprep.subr.mxu0 0.0
    %1802 = vmatpush1.msra.mxu0 0.0
    %1803 = vmatprep.mubr.f32.mxu0 0.0
    %v1804 = vand.u32 %v1360, 4294901760
    %v1805 = vsub.f32 %v1360, %v1804
    %v1806 = vand.u32 %v1805, 4294901760
    %1807 = vmatmul.mubr.f32.gmra.mrb[0].mxu0 %v1806
    %v1808 = vpop.f32.mrb[0].mxu0
    %v1809 = vadd.f32 %v1720, %v1808
    %v1810 = vpop.f32.mrb[0].mxu0
    %1811 = vdwg.mxu0
    %1812 = vmatprep.subr.mxu0 0.0
    %v1813 = vand.u32 %v1361, 4294901760
    %v1814 = vsub.f32 %v1361, %v1813
    %v1815 = vand.u32 %v1814, 4294901760
    %1816 = vmatpush1.msra.mxu0 %v1815
    %1817 = vmatprep.subr.mxu0 0.0
    %v1818 = vand.u32 %v1362, 4294901760
    %v1819 = vsub.f32 %v1362, %v1818
    %v1820 = vand.u32 %v1819, 4294901760
    %1821 = vmatpush1.msra.mxu0 %v1820
    %1822 = vmatprep.subr.mxu0 0.0
    %v1823 = vand.u32 %v1363, 4294901760
    %v1824 = vsub.f32 %v1363, %v1823
    %v1825 = vand.u32 %v1824, 4294901760
    %1826 = vmatpush1.msra.mxu0 %v1825
    %1827 = vmatprep.subr.mxu0 0.0
    %v1828 = vand.u32 %v1364, 4294901760
    %v1829 = vsub.f32 %v1364, %v1828
    %v1830 = vand.u32 %v1829, 4294901760
    %1831 = vmatpush1.msra.mxu0 %v1830
    %1832 = vmatprep.subr.mxu0 0.0
    %v1833 = vand.u32 %v1365, 4294901760
    %v1834 = vsub.f32 %v1365, %v1833
    %v1835 = vand.u32 %v1834, 4294901760
    %1836 = vmatpush1.msra.mxu0 %v1835
    %1837 = vmatprep.subr.mxu0 0.0
    %v1838 = vand.u32 %v1366, 4294901760
    %v1839 = vsub.f32 %v1366, %v1838
    %v1840 = vand.u32 %v1839, 4294901760
    %1841 = vmatpush1.msra.mxu0 %v1840
    %1842 = vmatprep.subr.mxu0 0.0
    %v1843 = vand.u32 %v1367, 4294901760
    %v1844 = vsub.f32 %v1367, %v1843
    %v1845 = vand.u32 %v1844, 4294901760
    %1846 = vmatpush1.msra.mxu0 %v1845
    %1847 = vmatprep.subr.mxu0 0.0
    %v1848 = vand.u32 %v1368, 4294901760
    %v1849 = vsub.f32 %v1368, %v1848
    %v1850 = vand.u32 %v1849, 4294901760
    %1851 = vmatpush1.msra.mxu0 %v1850
    %1852 = vmatprep.subr.mxu0 0.0
    %v1853 = vand.u32 %v1369, 4294901760
    %v1854 = vsub.f32 %v1369, %v1853
    %v1855 = vand.u32 %v1854, 4294901760
    %1856 = vmatpush1.msra.mxu0 %v1855
    %1857 = vmatprep.subr.mxu0 0.0
    %v1858 = vand.u32 %v1370, 4294901760
    %v1859 = vsub.f32 %v1370, %v1858
    %v1860 = vand.u32 %v1859, 4294901760
    %1861 = vmatpush1.msra.mxu0 %v1860
    %1862 = vmatprep.subr.mxu0 0.0
    %v1863 = vand.u32 %v1371, 4294901760
    %v1864 = vsub.f32 %v1371, %v1863
    %v1865 = vand.u32 %v1864, 4294901760
    %1866 = vmatpush1.msra.mxu0 %v1865
    %1867 = vmatprep.subr.mxu0 0.0
    %v1868 = vand.u32 %v1372, 4294901760
    %v1869 = vsub.f32 %v1372, %v1868
    %v1870 = vand.u32 %v1869, 4294901760
    %1871 = vmatpush1.msra.mxu0 %v1870
    %1872 = vmatprep.subr.mxu0 0.0
    %v1873 = vand.u32 %v1373, 4294901760
    %v1874 = vsub.f32 %v1373, %v1873
    %v1875 = vand.u32 %v1874, 4294901760
    %1876 = vmatpush1.msra.mxu0 %v1875
    %1877 = vmatprep.subr.mxu0 0.0
    %v1878 = vand.u32 %v1374, 4294901760
    %v1879 = vsub.f32 %v1374, %v1878
    %v1880 = vand.u32 %v1879, 4294901760
    %1881 = vmatpush1.msra.mxu0 %v1880
    %1882 = vmatprep.subr.mxu0 0.0
    %v1883 = vand.u32 %v1375, 4294901760
    %v1884 = vsub.f32 %v1375, %v1883
    %v1885 = vand.u32 %v1884, 4294901760
    %1886 = vmatpush1.msra.mxu0 %v1885
    %1887 = vmatprep.subr.mxu0 0.0
    %v1888 = vand.u32 %v1376, 4294901760
    %v1889 = vsub.f32 %v1376, %v1888
    %v1890 = vand.u32 %v1889, 4294901760
    %1891 = vmatpush1.msra.mxu0 %v1890
    %1892 = vmatprep.subr.mxu0 0.0
    %1893 = vmatpush1.msra.mxu0 0.0
    %1894 = vmatprep.subr.mxu0 0.0
    %1895 = vmatpush1.msra.mxu0 0.0
    %1896 = vmatprep.subr.mxu0 0.0
    %1897 = vmatpush1.msra.mxu0 0.0
    %1898 = vmatprep.subr.mxu0 0.0
    %1899 = vmatpush1.msra.mxu0 0.0
    %1900 = vmatprep.subr.mxu0 0.0
    %1901 = vmatpush1.msra.mxu0 0.0
    %1902 = vmatprep.subr.mxu0 0.0
    %1903 = vmatpush1.msra.mxu0 0.0
    %1904 = vmatprep.subr.mxu0 0.0
    %1905 = vmatpush1.msra.mxu0 0.0
    %1906 = vmatprep.subr.mxu0 0.0
    %1907 = vmatpush1.msra.mxu0 0.0
    %1908 = vmatprep.subr.mxu0 0.0
    %1909 = vmatpush1.msra.mxu0 0.0
    %1910 = vmatprep.subr.mxu0 0.0
    %1911 = vmatpush1.msra.mxu0 0.0
    %1912 = vmatprep.subr.mxu0 0.0
    %1913 = vmatpush1.msra.mxu0 0.0
    %1914 = vmatprep.subr.mxu0 0.0
    %1915 = vmatpush1.msra.mxu0 0.0
    %1916 = vmatprep.subr.mxu0 0.0
    %1917 = vmatpush1.msra.mxu0 0.0
    %1918 = vmatprep.subr.mxu0 0.0
    %1919 = vmatpush1.msra.mxu0 0.0
    %1920 = vmatprep.subr.mxu0 0.0
    %1921 = vmatpush1.msra.mxu0 0.0
    %1922 = vmatprep.subr.mxu0 0.0
    %1923 = vmatpush1.msra.mxu0 0.0
    %1924 = vmatprep.mubr.f32.mxu0 0.0
    %v1925 = vand.u32 %v1360, 4294901760
    %1926 = vmatmul.mubr.f32.gmra.mrb[0].mxu0 %v1925
    %v1927 = vpop.f32.mrb[0].mxu0
    %v1928 = vadd.f32 %v1809, %v1927
    %v1929 = vpop.f32.mrb[0].mxu0
    %1930 = vdwg.mxu0
    %1931 = vmatprep.subr.mxu0 0.0
    %v1932 = vand.u32 %v1361, 4294901760
    %1933 = vmatpush1.msra.mxu0 %v1932
    %1934 = vmatprep.subr.mxu0 0.0
    %v1935 = vand.u32 %v1362, 4294901760
    %1936 = vmatpush1.msra.mxu0 %v1935
    %1937 = vmatprep.subr.mxu0 0.0
    %v1938 = vand.u32 %v1363, 4294901760
    %1939 = vmatpush1.msra.mxu0 %v1938
    %1940 = vmatprep.subr.mxu0 0.0
    %v1941 = vand.u32 %v1364, 4294901760
    %1942 = vmatpush1.msra.mxu0 %v1941
    %1943 = vmatprep.subr.mxu0 0.0
    %v1944 = vand.u32 %v1365, 4294901760
    %1945 = vmatpush1.msra.mxu0 %v1944
    %1946 = vmatprep.subr.mxu0 0.0
    %v1947 = vand.u32 %v1366, 4294901760
    %1948 = vmatpush1.msra.mxu0 %v1947
    %1949 = vmatprep.subr.mxu0 0.0
    %v1950 = vand.u32 %v1367, 4294901760
    %1951 = vmatpush1.msra.mxu0 %v1950
    %1952 = vmatprep.subr.mxu0 0.0
    %v1953 = vand.u32 %v1368, 4294901760
    %1954 = vmatpush1.msra.mxu0 %v1953
    %1955 = vmatprep.subr.mxu0 0.0
    %v1956 = vand.u32 %v1369, 4294901760
    %1957 = vmatpush1.msra.mxu0 %v1956
    %1958 = vmatprep.subr.mxu0 0.0
    %v1959 = vand.u32 %v1370, 4294901760
    %1960 = vmatpush1.msra.mxu0 %v1959
    %1961 = vmatprep.subr.mxu0 0.0
    %v1962 = vand.u32 %v1371, 4294901760
    %1963 = vmatpush1.msra.mxu0 %v1962
    %1964 = vmatprep.subr.mxu0 0.0
    %v1965 = vand.u32 %v1372, 4294901760
    %1966 = vmatpush1.msra.mxu0 %v1965
    %1967 = vmatprep.subr.mxu0 0.0
    %v1968 = vand.u32 %v1373, 4294901760
    %1969 = vmatpush1.msra.mxu0 %v1968
    %1970 = vmatprep.subr.mxu0 0.0
    %v1971 = vand.u32 %v1374, 4294901760
    %1972 = vmatpush1.msra.mxu0 %v1971
    %1973 = vmatprep.subr.mxu0 0.0
    %v1974 = vand.u32 %v1375, 4294901760
    %1975 = vmatpush1.msra.mxu0 %v1974
    %1976 = vmatprep.subr.mxu0 0.0
    %v1977 = vand.u32 %v1376, 4294901760
    %1978 = vmatpush1.msra.mxu0 %v1977
    %1979 = vmatprep.subr.mxu0 0.0
    %1980 = vmatpush1.msra.mxu0 0.0
    %1981 = vmatprep.subr.mxu0 0.0
    %1982 = vmatpush1.msra.mxu0 0.0
    %1983 = vmatprep.subr.mxu0 0.0
    %1984 = vmatpush1.msra.mxu0 0.0
    %1985 = vmatprep.subr.mxu0 0.0
    %1986 = vmatpush1.msra.mxu0 0.0
    %1987 = vmatprep.subr.mxu0 0.0
    %1988 = vmatpush1.msra.mxu0 0.0
    %1989 = vmatprep.subr.mxu0 0.0
    %1990 = vmatpush1.msra.mxu0 0.0
    %1991 = vmatprep.subr.mxu0 0.0
    %1992 = vmatpush1.msra.mxu0 0.0
    %1993 = vmatprep.subr.mxu0 0.0
    %1994 = vmatpush1.msra.mxu0 0.0
    %1995 = vmatprep.subr.mxu0 0.0
    %1996 = vmatpush1.msra.mxu0 0.0
    %1997 = vmatprep.subr.mxu0 0.0
    %1998 = vmatpush1.msra.mxu0 0.0
    %1999 = vmatprep.subr.mxu0 0.0
    %2000 = vmatpush1.msra.mxu0 0.0
    %2001 = vmatprep.subr.mxu0 0.0
    %2002 = vmatpush1.msra.mxu0 0.0
    %2003 = vmatprep.subr.mxu0 0.0
    %2004 = vmatpush1.msra.mxu0 0.0
    %2005 = vmatprep.subr.mxu0 0.0
    %2006 = vmatpush1.msra.mxu0 0.0
    %2007 = vmatprep.subr.mxu0 0.0
    %2008 = vmatpush1.msra.mxu0 0.0
    %2009 = vmatprep.subr.mxu0 0.0
    %2010 = vmatpush1.msra.mxu0 0.0
    %2011 = vmatprep.mubr.f32.mxu0 0.0
    %v2012 = vand.u32 %v1360, 4294901760
    %2013 = vmatmul.mubr.f32.gmra.mrb[0].mxu0 %v2012
    %v2014 = vpop.f32.mrb[0].mxu0
    %v2015 = vadd.f32 %v1928, %v2014
    %v2016 = vpop.f32.mrb[0].mxu0
    %2017 = vdwg.mxu0
    %v2018 = vmul.f32 %v57, %v2015
    %v2019 = vld [vmem:[%s1] sm:$0x1]
    %v2021 = vlaneseq
    %v2022 = vshrl.u32 %v2021, 7
    %v2023 = vsub.s32 0, %v2022
    %v2024 = vrot.slane %v2019, %v2023
    %v2026 = vmul.f32 %v2024, %v2018
    %2027 = vst [vmem:[#allocation8] sm:$0xf] %v2026
    // Predicated region
    $region30: #{tpu_custom_call.1} parent=1 // pred_check
      _
    $region31: #{tpu_custom_call.1} parent=1 // pred_check_branch
      %2029 = sbr.rel (0) target = $region33
    $region32: #{tpu_custom_call.1} parent=1 // pred_region
      %s2031 = ssub.s32 64, 64
      %2032 = vsyncadd [#allocation4], %s2031
      %s2034 = sshll.u32 [#allocation8], 4
      %s2035 = int_to_ptr.vmem [resolvable:$true] %s2034
      %2037 = dma.vmem_to_hbm [thread:$0]  %s2035, 64, %s4, [#allocation4]
    $region33: #{tpu_custom_call.1} parent=1 // pred_fallthru
      _
    // Predicated region
    $region34: #{tpu_custom_call.1} parent=1 // pred_check
      _
    $region35: #{tpu_custom_call.1} parent=1 // pred_check_branch
      %2039 = sbr.rel (0) target = $region37
    $region36: #{tpu_custom_call.1} parent=1 // pred_region
      %2040 = dma.done [#allocation4], 64
    $region37: #{tpu_custom_call.1} parent=1 // pred_fallthru
      _
    %2041 = vsyncpa [#allocation3], 1
    %2042 = vsyncpa [#allocation6], 1
    %2043 = vsyncpa [#allocation4], 1

</llo_original>
